<compile_context>
chip_gen: v7x
topology: tpu7x:2x2x1
jax: 0.10.0
libtpu: 0.0.40
codegen_flags: <defaults>
</compile_context>

<pallas_src>
import functools

import jax
import jax.numpy as jnp
from jax.experimental import pallas as pl
from jax.experimental.pallas import tpu as pltpu


# ---------------------------------------------------------------------------
# In-kernel math helpers
# ---------------------------------------------------------------------------
def _gelu_tanh_f32(x):
    """tanh-approx GELU in f32 (tanh on the EUP); |err| vs exact erf GELU ~3e-4."""
    c = 0.7978845608028654  # sqrt(2/pi)
    return 0.5 * x * (1.0 + jnp.tanh(c * (x + 0.044715 * (x * x * x))))


def _conv3x3(src_ref, w_ref, b_ref, ml_ref, mr_ref, *, hw, width, pad):
    """3x3 'same' conv in (C, H*W) layout as 9 accumulating MXU matmuls.

    src_ref : (Cin, 2*pad + H*W) bf16; feature map at [:, pad:pad+H*W], zero margins.
    w_ref   : (9, Cout, Cin) bf16, tap index t = ky*3 + kx (BN folded in).
    b_ref   : (Cout, 1) f32 folded bias.
    ml/mr   : (1, H*W) f32 masks zeroing kx=0 / kx=2 taps at image-row edges.
    Tap (ky, kx) is a contiguous lane-shifted window (shift (ky-1)*W + (kx-1));
    vertical out-of-range reads land in the zero margins, horizontal ones are masked
    once per kx-group after the matmuls (2 mask multiplies per conv).
    """
    def tap(ky, kx):
        s = (ky - 1) * width + (kx - 1)
        win = src_ref[:, pad + s:pad + s + hw]                 # (Cin, H*W) bf16
        return jnp.dot(w_ref[ky * 3 + kx], win,
                       preferred_element_type=jnp.float32)     # (Cout, H*W) f32

    center = tap(0, 1) + tap(1, 1) + tap(2, 1)
    left = tap(0, 0) + tap(1, 0) + tap(2, 0)
    right = tap(0, 2) + tap(1, 2) + tap(2, 2)
    return center + ml_ref[...] * left + mr_ref[...] * right + b_ref[...]


def _zero_margins(buf_ref, pad, hw):
    """Zero only the 2*pad margin columns (the interior is fully overwritten)."""
    c, total = buf_ref.shape
    buf_ref[:, :pad] = jnp.zeros((c, pad), buf_ref.dtype)
    buf_ref[:, pad + hw:] = jnp.zeros((c, total - pad - hw), buf_ref.dtype)


# ---------------------------------------------------------------------------
# Fused kernel: conv1+BN+GELU -> conv2+BN+GELU -> (+ residual) / 1.414
# ---------------------------------------------------------------------------
def _fused_kernel(x_ref, w1_ref, b1_ref, w2_ref, b2_ref, ml_ref, mr_ref,
                  out_ref, xs_ref, x1s_ref, *, width, pad, is_res, same_channels):
    hw = out_ref.shape[2]

    # Only the margins need zeroing; per-step so megacore grid splitting is safe.
    _zero_margins(xs_ref, pad, hw)
    _zero_margins(x1s_ref, pad, hw)

    # Stage the (already bf16) input into the zero-margined buffer (aligned store:
    # pad is a multiple of 128 lanes).
    xs_ref[:, pad:pad + hw] = x_ref[0].astype(xs_ref.dtype)

    # conv1 (+ folded BN) + GELU.
    y1 = _gelu_tanh_f32(_conv3x3(xs_ref, w1_ref, b1_ref, ml_ref, mr_ref,
                                 hw=hw, width=width, pad=pad))

    # x1 lives only in VMEM.
    x1s_ref[:, pad:pad + hw] = y1.astype(x1s_ref.dtype)

    # conv2 (+ folded BN) + GELU.
    y2 = _gelu_tanh_f32(_conv3x3(x1s_ref, w2_ref, b2_ref, ml_ref, mr_ref,
                                 hw=hw, width=width, pad=pad))

    if is_res:
        res = x_ref[0].astype(jnp.float32) if same_channels else y1   # f32 residual
        y2 = (res + y2) / 1.414

    out_ref[...] = y2[None].astype(out_ref.dtype)


# ---------------------------------------------------------------------------
# Wrapper (layout glue + eval-mode BN folding)
# ---------------------------------------------------------------------------
def _fold_bn_into_conv(w, b, gamma, beta, mean, var, eps=1e-5):
    """w: (Cout, Cin, 3, 3) -> (9, Cout, Cin) bf16 (tap = ky*3+kx); bias -> (Cout,1) f32."""
    scale = gamma / jnp.sqrt(var + eps)
    w_f = w * scale[:, None, None, None]
    b_f = (b - mean) * scale + beta
    w_mat = jnp.transpose(w_f, (2, 3, 0, 1)).reshape(9, w.shape[0], w.shape[1])
    return w_mat.astype(jnp.bfloat16), b_f.reshape(-1, 1).astype(jnp.float32)


def residual_conv_block(x_nchw, params, *, is_res):
    """Forward pass matching ResidualConvBlock.forward (eval-mode BN)."""
    n, cin, h, w = x_nchw.shape
    cout = params["w1"].shape[0]
    same_channels = cin == cout
    hw = h * w
    pad = ((w + 1 + 127) // 128) * 128          # >= W+1 and lane-tile aligned

    # NCHW -> (N, C, H*W): pure reshape (no HBM transpose); bf16 halves input DMA.
    x_flat = x_nchw.reshape(n, cin, hw).astype(jnp.bfloat16)

    w1k, b1k = _fold_bn_into_conv(params["w1"], params["b1"], params["g1"],
                                  params["beta1"], params["m1"], params["v1"])
    w2k, b2k = _fold_bn_into_conv(params["w2"], params["b2"], params["g2"],
                                  params["beta2"], params["m2"], params["v2"])

    # Row-edge masks for the horizontal taps (dx = -1 / +1), tiny constants.
    col = jnp.arange(hw, dtype=jnp.int32) % w
    m_left = (col != 0).astype(jnp.float32).reshape(1, hw)
    m_right = (col != w - 1).astype(jnp.float32).reshape(1, hw)

    kernel = functools.partial(_fused_kernel, width=w, pad=pad,
                               is_res=is_res, same_channels=same_channels)

    out_flat = pl.pallas_call(
        kernel,
        out_shape=jax.ShapeDtypeStruct((n, cout, hw), jnp.float32),
        grid=(n,),
        in_specs=[
            pl.BlockSpec((1, cin, hw), lambda i: (i, 0, 0)),
            pl.BlockSpec((9, cout, cin), lambda i: (0, 0, 0)),
            pl.BlockSpec((cout, 1), lambda i: (0, 0)),
            pl.BlockSpec((9, cout, cout), lambda i: (0, 0, 0)),
            pl.BlockSpec((cout, 1), lambda i: (0, 0)),
            pl.BlockSpec((1, hw), lambda i: (0, 0)),
            pl.BlockSpec((1, hw), lambda i: (0, 0)),
        ],
        out_specs=pl.BlockSpec((1, cout, hw), lambda i: (i, 0, 0)),
        scratch_shapes=[
            pltpu.VMEM((cin, 2 * pad + hw), jnp.bfloat16),    # zero-margined x
            pltpu.VMEM((cout, 2 * pad + hw), jnp.bfloat16),   # zero-margined x1
        ],
        compiler_params=pltpu.CompilerParams(
            dimension_semantics=("parallel",),
            # Tiny working set here; for large HW*C raise toward ~96 MiB on v5e/v6e
            # (or add the H-row grid axis on v7x) per the tuning notes above.
            vmem_limit_bytes=32 * 1024 * 1024,
        ),
    )(x_flat, w1k, b1k, w2k, b2k, m_left, m_right)

    return out_flat.reshape(n, cout, h, w)  # pure reshape back to NCHW


# ---------------------------------------------------------------------------
# Pure-JAX f32 reference (exact-erf GELU, eval-mode BN) for the sanity check
# ---------------------------------------------------------------------------
def _reference(x_nchw, params, *, is_res):
    x = jnp.transpose(x_nchw, (0, 2, 3, 1)).astype(jnp.float32)

    def conv_bn_gelu(xin, w, b, g, beta, m, v):
        scale = g / jnp.sqrt(v + 1e-5)
        w_f = jnp.transpose(w * scale[:, None, None, None], (2, 3, 1, 0))  # HWIO
        b_f = (b - m) * scale + beta
        y = jax.lax.conv_general_dilated(
            xin, w_f, window_strides=(1, 1), padding="SAME",
            dimension_numbers=("NHWC", "HWIO", "NHWC"))
        y = y + b_f
        return 0.5 * y * (1.0 + jax.lax.erf(y * 0.7071067811865476))

    x1 = conv_bn_gelu(x, params["w1"], params["b1"], params["g1"],
                      params["beta1"], params["m1"], params["v1"])
    x2 = conv_bn_gelu(x1, params["w2"], params["b2"], params["g2"],
                      params["beta2"], params["m2"], params["v2"])
    if is_res:
        out = (x + x2) / 1.414 if x.shape[-1] == x2.shape[-1] else (x1 + x2) / 1.414
    else:
        out = x2
    return jnp.transpose(out, (0, 3, 1, 2))


# ---------------------------------------------------------------------------
if __name__ == "__main__":
    N, Cin, Cout, H, W = 2, 4, 4, 16, 16
    IS_RES = True

    key = jax.random.PRNGKey(0)
    k_x, k_w1, k_b1, k_w2, k_b2 = jax.random.split(key, 5)

    bound1 = 1.0 / ((Cin * 9) ** 0.5)
    bound2 = 1.0 / ((Cout * 9) ** 0.5)
    params = {
        # Conv2d weights/biases (deterministic uniform init, PyTorch-like scale)
        "w1": jax.random.uniform(k_w1, (Cout, Cin, 3, 3), jnp.float32, -bound1, bound1),
        "b1": jax.random.uniform(k_b1, (Cout,), jnp.float32, -bound1, bound1),
        "w2": jax.random.uniform(k_w2, (Cout, Cout, 3, 3), jnp.float32, -bound2, bound2),
        "b2": jax.random.uniform(k_b2, (Cout,), jnp.float32, -bound2, bound2),
        # BatchNorm2d default-initialized params / running stats (eval mode)
        "g1": jnp.ones((Cout,), jnp.float32), "beta1": jnp.zeros((Cout,), jnp.float32),
        "m1": jnp.zeros((Cout,), jnp.float32), "v1": jnp.ones((Cout,), jnp.float32),
        "g2": jnp.ones((Cout,), jnp.float32), "beta2": jnp.zeros((Cout,), jnp.float32),
        "m2": jnp.zeros((Cout,), jnp.float32), "v2": jnp.ones((Cout,), jnp.float32),
    }

    x = jax.random.normal(k_x, (N, Cin, H, W), jnp.float32)

    out = jax.block_until_ready(residual_conv_block(x, params, is_res=IS_RES))
    ref = jax.block_until_ready(_reference(x, params, is_res=IS_RES))

    assert out.shape == (N, Cout, H, W), out.shape
    # bf16 input/matmul operands + tanh-approx GELU vs the f32/erf reference.
    max_err = float(jnp.max(jnp.abs(out - ref)))
    assert jnp.allclose(out, ref, atol=3e-2, rtol=3e-2), max_err

    print("KERNEL_OK")
</pallas_src>

<mosaic_0001>
module attributes {stable_mosaic.version = 11 : i64} {
  func.func @_fused_kernel(%arg0: i32, %arg1: memref<1x4x256xbf16, #tpu.memory_space<vmem>>, %arg2: memref<9x4x4xbf16, #tpu.memory_space<vmem>>, %arg3: memref<4x1xf32, #tpu.memory_space<vmem>>, %arg4: memref<9x4x4xbf16, #tpu.memory_space<vmem>>, %arg5: memref<4x1xf32, #tpu.memory_space<vmem>>, %arg6: memref<1x256xf32, #tpu.memory_space<vmem>>, %arg7: memref<1x256xf32, #tpu.memory_space<vmem>>, %arg8: memref<1x4x256xf32, #tpu.memory_space<vmem>>, %arg9: memref<4x512xbf16, #tpu.memory_space<vmem>>, %arg10: memref<4x512xbf16, #tpu.memory_space<vmem>>) attributes {dimension_semantics = [#tpu.dimension_semantics<parallel>], iteration_bounds = array<i64: 2>, scalar_prefetch = 0 : i64, scratch_operands = 2 : i64, tpu.core_type = #tpu.core_type<tc>, window_params = [{transform_indices = @transform_0, window_bounds = array<i64: 1, 4, 256>}, {pipeline_mode = #tpu.pipeline_mode<synchronous>, transform_indices = @transform_1, window_bounds = array<i64: 9, 4, 4>}, {pipeline_mode = #tpu.pipeline_mode<synchronous>, transform_indices = @transform_2, window_bounds = array<i64: 4, 1>}, {pipeline_mode = #tpu.pipeline_mode<synchronous>, transform_indices = @transform_3, window_bounds = array<i64: 9, 4, 4>}, {pipeline_mode = #tpu.pipeline_mode<synchronous>, transform_indices = @transform_4, window_bounds = array<i64: 4, 1>}, {pipeline_mode = #tpu.pipeline_mode<synchronous>, transform_indices = @transform_5, window_bounds = array<i64: 1, 256>}, {pipeline_mode = #tpu.pipeline_mode<synchronous>, transform_indices = @transform_6, window_bounds = array<i64: 1, 256>}, {transform_indices = @transform_7, window_bounds = array<i64: 1, 4, 256>}]} {
    %cst = arith.constant 0.000000e+00 : bf16
    %0 = vector.broadcast %cst : bf16 to vector<4x128xbf16>
    %c0 = arith.constant 0 : index
    %c0_0 = arith.constant 0 : index
    %1 = vector.load %arg9[%c0, %c0_0] : memref<4x512xbf16, #tpu.memory_space<vmem>>, vector<4x128xbf16>
    tpu.vector_store %arg9[%c0, %c0_0], %0 {strides = array<i32>} : memref<4x512xbf16, #tpu.memory_space<vmem>>, vector<4x128xbf16>,
    %cst_1 = arith.constant 0.000000e+00 : bf16
    %2 = vector.broadcast %cst_1 : bf16 to vector<4x128xbf16>
    %c0_2 = arith.constant 0 : index
    %c384 = arith.constant 384 : index
    %3 = vector.load %arg9[%c0_2, %c384] : memref<4x512xbf16, #tpu.memory_space<vmem>>, vector<4x128xbf16>
    tpu.vector_store %arg9[%c0_2, %c384], %2 {strides = array<i32>} : memref<4x512xbf16, #tpu.memory_space<vmem>>, vector<4x128xbf16>,
    %cst_3 = arith.constant 0.000000e+00 : bf16
    %4 = vector.broadcast %cst_3 : bf16 to vector<4x128xbf16>
    %c0_4 = arith.constant 0 : index
    %c0_5 = arith.constant 0 : index
    %5 = vector.load %arg10[%c0_4, %c0_5] : memref<4x512xbf16, #tpu.memory_space<vmem>>, vector<4x128xbf16>
    tpu.vector_store %arg10[%c0_4, %c0_5], %4 {strides = array<i32>} : memref<4x512xbf16, #tpu.memory_space<vmem>>, vector<4x128xbf16>,
    %cst_6 = arith.constant 0.000000e+00 : bf16
    %6 = vector.broadcast %cst_6 : bf16 to vector<4x128xbf16>
    %c0_7 = arith.constant 0 : index
    %c384_8 = arith.constant 384 : index
    %7 = vector.load %arg10[%c0_7, %c384_8] : memref<4x512xbf16, #tpu.memory_space<vmem>>, vector<4x128xbf16>
    tpu.vector_store %arg10[%c0_7, %c384_8], %6 {strides = array<i32>} : memref<4x512xbf16, #tpu.memory_space<vmem>>, vector<4x128xbf16>,
    %c0_9 = arith.constant 0 : index
    %c0_10 = arith.constant 0 : index
    %c0_11 = arith.constant 0 : index
    %8 = vector.load %arg1[%c0_9, %c0_10, %c0_11] : memref<1x4x256xbf16, #tpu.memory_space<vmem>>, vector<1x4x256xbf16>
    %9 = vector.shape_cast %8 : vector<1x4x256xbf16> to vector<4x256xbf16>
    %c0_12 = arith.constant 0 : index
    %c128 = arith.constant 128 : index
    %10 = vector.load %arg9[%c0_12, %c128] : memref<4x512xbf16, #tpu.memory_space<vmem>>, vector<4x256xbf16>
    tpu.vector_store %arg9[%c0_12, %c128], %9 {strides = array<i32>} : memref<4x512xbf16, #tpu.memory_space<vmem>>, vector<4x256xbf16>,
    %c0_13 = arith.constant 0 : index
    %c112 = arith.constant 112 : index
    %11 = vector.load %arg9[%c0_13, %c112] : memref<4x512xbf16, #tpu.memory_space<vmem>>, vector<4x256xbf16>
    %c1 = arith.constant 1 : index
    %c0_14 = arith.constant 0 : index
    %c0_15 = arith.constant 0 : index
    %12 = vector.load %arg2[%c1, %c0_14, %c0_15] : memref<9x4x4xbf16, #tpu.memory_space<vmem>>, vector<1x4x4xbf16>
    %13 = vector.shape_cast %12 : vector<1x4x4xbf16> to vector<4x4xbf16>
    %cst_16 = arith.constant dense<0.000000e+00> : vector<4x256xf32>
    %14 = tpu.matmul %13, %11, %cst_16 {dimension_numbers = #tpu.dot_dimension_numbers<[1], [0], [0], [1], [0, 0, 1, 1], [], []>} : vector<4x4xbf16>, vector<4x256xbf16>, vector<4x256xf32> -> vector<4x256xf32>
    %c0_17 = arith.constant 0 : index
    %c128_18 = arith.constant 128 : index
    %15 = vector.load %arg9[%c0_17, %c128_18] : memref<4x512xbf16, #tpu.memory_space<vmem>>, vector<4x256xbf16>
    %c4 = arith.constant 4 : index
    %c0_19 = arith.constant 0 : index
    %c0_20 = arith.constant 0 : index
    %16 = vector.load %arg2[%c4, %c0_19, %c0_20] : memref<9x4x4xbf16, #tpu.memory_space<vmem>>, vector<1x4x4xbf16>
    %17 = vector.shape_cast %16 : vector<1x4x4xbf16> to vector<4x4xbf16>
    %cst_21 = arith.constant dense<0.000000e+00> : vector<4x256xf32>
    %18 = tpu.matmul %17, %15, %cst_21 {dimension_numbers = #tpu.dot_dimension_numbers<[1], [0], [0], [1], [0, 0, 1, 1], [], []>} : vector<4x4xbf16>, vector<4x256xbf16>, vector<4x256xf32> -> vector<4x256xf32>
    %19 = arith.addf %14, %18 : vector<4x256xf32>
    %c0_22 = arith.constant 0 : index
    %c144 = arith.constant 144 : index
    %20 = vector.load %arg9[%c0_22, %c144] : memref<4x512xbf16, #tpu.memory_space<vmem>>, vector<4x256xbf16>
    %c7 = arith.constant 7 : index
    %c0_23 = arith.constant 0 : index
    %c0_24 = arith.constant 0 : index
    %21 = vector.load %arg2[%c7, %c0_23, %c0_24] : memref<9x4x4xbf16, #tpu.memory_space<vmem>>, vector<1x4x4xbf16>
    %22 = vector.shape_cast %21 : vector<1x4x4xbf16> to vector<4x4xbf16>
    %cst_25 = arith.constant dense<0.000000e+00> : vector<4x256xf32>
    %23 = tpu.matmul %22, %20, %cst_25 {dimension_numbers = #tpu.dot_dimension_numbers<[1], [0], [0], [1], [0, 0, 1, 1], [], []>} : vector<4x4xbf16>, vector<4x256xbf16>, vector<4x256xf32> -> vector<4x256xf32>
    %24 = arith.addf %19, %23 : vector<4x256xf32>
    %c0_26 = arith.constant 0 : index
    %c111 = arith.constant 111 : index
    %25 = vector.load %arg9[%c0_26, %c111] : memref<4x512xbf16, #tpu.memory_space<vmem>>, vector<4x256xbf16>
    %c0_27 = arith.constant 0 : index
    %c0_28 = arith.constant 0 : index
    %c0_29 = arith.constant 0 : index
    %26 = vector.load %arg2[%c0_27, %c0_28, %c0_29] : memref<9x4x4xbf16, #tpu.memory_space<vmem>>, vector<1x4x4xbf16>
    %27 = vector.shape_cast %26 : vector<1x4x4xbf16> to vector<4x4xbf16>
    %cst_30 = arith.constant dense<0.000000e+00> : vector<4x256xf32>
    %28 = tpu.matmul %27, %25, %cst_30 {dimension_numbers = #tpu.dot_dimension_numbers<[1], [0], [0], [1], [0, 0, 1, 1], [], []>} : vector<4x4xbf16>, vector<4x256xbf16>, vector<4x256xf32> -> vector<4x256xf32>
    %c0_31 = arith.constant 0 : index
    %c127 = arith.constant 127 : index
    %29 = vector.load %arg9[%c0_31, %c127] : memref<4x512xbf16, #tpu.memory_space<vmem>>, vector<4x256xbf16>
    %c3 = arith.constant 3 : index
    %c0_32 = arith.constant 0 : index
    %c0_33 = arith.constant 0 : index
    %30 = vector.load %arg2[%c3, %c0_32, %c0_33] : memref<9x4x4xbf16, #tpu.memory_space<vmem>>, vector<1x4x4xbf16>
    %31 = vector.shape_cast %30 : vector<1x4x4xbf16> to vector<4x4xbf16>
    %cst_34 = arith.constant dense<0.000000e+00> : vector<4x256xf32>
    %32 = tpu.matmul %31, %29, %cst_34 {dimension_numbers = #tpu.dot_dimension_numbers<[1], [0], [0], [1], [0, 0, 1, 1], [], []>} : vector<4x4xbf16>, vector<4x256xbf16>, vector<4x256xf32> -> vector<4x256xf32>
    %33 = arith.addf %28, %32 : vector<4x256xf32>
    %c0_35 = arith.constant 0 : index
    %c143 = arith.constant 143 : index
    %34 = vector.load %arg9[%c0_35, %c143] : memref<4x512xbf16, #tpu.memory_space<vmem>>, vector<4x256xbf16>
    %c6 = arith.constant 6 : index
    %c0_36 = arith.constant 0 : index
    %c0_37 = arith.constant 0 : index
    %35 = vector.load %arg2[%c6, %c0_36, %c0_37] : memref<9x4x4xbf16, #tpu.memory_space<vmem>>, vector<1x4x4xbf16>
    %36 = vector.shape_cast %35 : vector<1x4x4xbf16> to vector<4x4xbf16>
    %cst_38 = arith.constant dense<0.000000e+00> : vector<4x256xf32>
    %37 = tpu.matmul %36, %34, %cst_38 {dimension_numbers = #tpu.dot_dimension_numbers<[1], [0], [0], [1], [0, 0, 1, 1], [], []>} : vector<4x4xbf16>, vector<4x256xbf16>, vector<4x256xf32> -> vector<4x256xf32>
    %38 = arith.addf %33, %37 : vector<4x256xf32>
    %c0_39 = arith.constant 0 : index
    %c113 = arith.constant 113 : index
    %39 = vector.load %arg9[%c0_39, %c113] : memref<4x512xbf16, #tpu.memory_space<vmem>>, vector<4x256xbf16>
    %c2 = arith.constant 2 : index
    %c0_40 = arith.constant 0 : index
    %c0_41 = arith.constant 0 : index
    %40 = vector.load %arg2[%c2, %c0_40, %c0_41] : memref<9x4x4xbf16, #tpu.memory_space<vmem>>, vector<1x4x4xbf16>
    %41 = vector.shape_cast %40 : vector<1x4x4xbf16> to vector<4x4xbf16>
    %cst_42 = arith.constant dense<0.000000e+00> : vector<4x256xf32>
    %42 = tpu.matmul %41, %39, %cst_42 {dimension_numbers = #tpu.dot_dimension_numbers<[1], [0], [0], [1], [0, 0, 1, 1], [], []>} : vector<4x4xbf16>, vector<4x256xbf16>, vector<4x256xf32> -> vector<4x256xf32>
    %c0_43 = arith.constant 0 : index
    %c129 = arith.constant 129 : index
    %43 = vector.load %arg9[%c0_43, %c129] : memref<4x512xbf16, #tpu.memory_space<vmem>>, vector<4x256xbf16>
    %c5 = arith.constant 5 : index
    %c0_44 = arith.constant 0 : index
    %c0_45 = arith.constant 0 : index
    %44 = vector.load %arg2[%c5, %c0_44, %c0_45] : memref<9x4x4xbf16, #tpu.memory_space<vmem>>, vector<1x4x4xbf16>
    %45 = vector.shape_cast %44 : vector<1x4x4xbf16> to vector<4x4xbf16>
    %cst_46 = arith.constant dense<0.000000e+00> : vector<4x256xf32>
    %46 = tpu.matmul %45, %43, %cst_46 {dimension_numbers = #tpu.dot_dimension_numbers<[1], [0], [0], [1], [0, 0, 1, 1], [], []>} : vector<4x4xbf16>, vector<4x256xbf16>, vector<4x256xf32> -> vector<4x256xf32>
    %47 = arith.addf %42, %46 : vector<4x256xf32>
    %c0_47 = arith.constant 0 : index
    %c145 = arith.constant 145 : index
    %48 = vector.load %arg9[%c0_47, %c145] : memref<4x512xbf16, #tpu.memory_space<vmem>>, vector<4x256xbf16>
    %c8 = arith.constant 8 : index
    %c0_48 = arith.constant 0 : index
    %c0_49 = arith.constant 0 : index
    %49 = vector.load %arg2[%c8, %c0_48, %c0_49] : memref<9x4x4xbf16, #tpu.memory_space<vmem>>, vector<1x4x4xbf16>
    %50 = vector.shape_cast %49 : vector<1x4x4xbf16> to vector<4x4xbf16>
    %cst_50 = arith.constant dense<0.000000e+00> : vector<4x256xf32>
    %51 = tpu.matmul %50, %48, %cst_50 {dimension_numbers = #tpu.dot_dimension_numbers<[1], [0], [0], [1], [0, 0, 1, 1], [], []>} : vector<4x4xbf16>, vector<4x256xbf16>, vector<4x256xf32> -> vector<4x256xf32>
    %52 = arith.addf %47, %51 : vector<4x256xf32>
    %c0_51 = arith.constant 0 : index
    %c0_52 = arith.constant 0 : index
    %53 = vector.load %arg6[%c0_51, %c0_52] : memref<1x256xf32, #tpu.memory_space<vmem>>, vector<1x256xf32>
    %54 = vector.broadcast %53 : vector<1x256xf32> to vector<4x256xf32>
    %55 = arith.mulf %54, %38 : vector<4x256xf32>
    %56 = arith.addf %24, %55 : vector<4x256xf32>
    %c0_53 = arith.constant 0 : index
    %c0_54 = arith.constant 0 : index
    %57 = vector.load %arg7[%c0_53, %c0_54] : memref<1x256xf32, #tpu.memory_space<vmem>>, vector<1x256xf32>
    %58 = vector.broadcast %57 : vector<1x256xf32> to vector<4x256xf32>
    %59 = arith.mulf %58, %52 : vector<4x256xf32>
    %60 = arith.addf %56, %59 : vector<4x256xf32>
    %c0_55 = arith.constant 0 : index
    %c0_56 = arith.constant 0 : index
    %61 = vector.load %arg3[%c0_55, %c0_56] : memref<4x1xf32, #tpu.memory_space<vmem>>, vector<4x1xf32>
    %62 = vector.broadcast %61 : vector<4x1xf32> to vector<4x256xf32>
    %63 = arith.addf %60, %62 : vector<4x256xf32>
    %cst_57 = arith.constant 5.000000e-01 : f32
    %64 = vector.broadcast %cst_57 : f32 to vector<4x256xf32>
    %65 = arith.mulf %64, %63 : vector<4x256xf32>
    %66 = arith.mulf %63, %63 : vector<4x256xf32>
    %67 = arith.mulf %66, %63 : vector<4x256xf32>
    %cst_58 = arith.constant 4.471500e-02 : f32
    %68 = vector.broadcast %cst_58 : f32 to vector<4x256xf32>
    %69 = arith.mulf %68, %67 : vector<4x256xf32>
    %70 = arith.addf %63, %69 : vector<4x256xf32>
    %cst_59 = arith.constant 0.797884583 : f32
    %71 = vector.broadcast %cst_59 : f32 to vector<4x256xf32>
    %72 = arith.mulf %71, %70 : vector<4x256xf32>
    %73 = math.tanh %72 : vector<4x256xf32>
    %cst_60 = arith.constant 1.000000e+00 : f32
    %74 = vector.broadcast %cst_60 : f32 to vector<4x256xf32>
    %75 = arith.addf %74, %73 : vector<4x256xf32>
    %76 = arith.mulf %65, %75 : vector<4x256xf32>
    %77 = arith.truncf %76 : vector<4x256xf32> to vector<4x256xbf16>
    %c0_61 = arith.constant 0 : index
    %c128_62 = arith.constant 128 : index
    %78 = vector.load %arg10[%c0_61, %c128_62] : memref<4x512xbf16, #tpu.memory_space<vmem>>, vector<4x256xbf16>
    tpu.vector_store %arg10[%c0_61, %c128_62], %77 {strides = array<i32>} : memref<4x512xbf16, #tpu.memory_space<vmem>>, vector<4x256xbf16>,
    %c0_63 = arith.constant 0 : index
    %c112_64 = arith.constant 112 : index
    %79 = vector.load %arg10[%c0_63, %c112_64] : memref<4x512xbf16, #tpu.memory_space<vmem>>, vector<4x256xbf16>
    %c1_65 = arith.constant 1 : index
    %c0_66 = arith.constant 0 : index
    %c0_67 = arith.constant 0 : index
    %80 = vector.load %arg4[%c1_65, %c0_66, %c0_67] : memref<9x4x4xbf16, #tpu.memory_space<vmem>>, vector<1x4x4xbf16>
    %81 = vector.shape_cast %80 : vector<1x4x4xbf16> to vector<4x4xbf16>
    %cst_68 = arith.constant dense<0.000000e+00> : vector<4x256xf32>
    %82 = tpu.matmul %81, %79, %cst_68 {dimension_numbers = #tpu.dot_dimension_numbers<[1], [0], [0], [1], [0, 0, 1, 1], [], []>} : vector<4x4xbf16>, vector<4x256xbf16>, vector<4x256xf32> -> vector<4x256xf32>
    %c0_69 = arith.constant 0 : index
    %c128_70 = arith.constant 128 : index
    %83 = vector.load %arg10[%c0_69, %c128_70] : memref<4x512xbf16, #tpu.memory_space<vmem>>, vector<4x256xbf16>
    %c4_71 = arith.constant 4 : index
    %c0_72 = arith.constant 0 : index
    %c0_73 = arith.constant 0 : index
    %84 = vector.load %arg4[%c4_71, %c0_72, %c0_73] : memref<9x4x4xbf16, #tpu.memory_space<vmem>>, vector<1x4x4xbf16>
    %85 = vector.shape_cast %84 : vector<1x4x4xbf16> to vector<4x4xbf16>
    %cst_74 = arith.constant dense<0.000000e+00> : vector<4x256xf32>
    %86 = tpu.matmul %85, %83, %cst_74 {dimension_numbers = #tpu.dot_dimension_numbers<[1], [0], [0], [1], [0, 0, 1, 1], [], []>} : vector<4x4xbf16>, vector<4x256xbf16>, vector<4x256xf32> -> vector<4x256xf32>
    %87 = arith.addf %82, %86 : vector<4x256xf32>
    %c0_75 = arith.constant 0 : index
    %c144_76 = arith.constant 144 : index
    %88 = vector.load %arg10[%c0_75, %c144_76] : memref<4x512xbf16, #tpu.memory_space<vmem>>, vector<4x256xbf16>
    %c7_77 = arith.constant 7 : index
    %c0_78 = arith.constant 0 : index
    %c0_79 = arith.constant 0 : index
    %89 = vector.load %arg4[%c7_77, %c0_78, %c0_79] : memref<9x4x4xbf16, #tpu.memory_space<vmem>>, vector<1x4x4xbf16>
    %90 = vector.shape_cast %89 : vector<1x4x4xbf16> to vector<4x4xbf16>
    %cst_80 = arith.constant dense<0.000000e+00> : vector<4x256xf32>
    %91 = tpu.matmul %90, %88, %cst_80 {dimension_numbers = #tpu.dot_dimension_numbers<[1], [0], [0], [1], [0, 0, 1, 1], [], []>} : vector<4x4xbf16>, vector<4x256xbf16>, vector<4x256xf32> -> vector<4x256xf32>
    %92 = arith.addf %87, %91 : vector<4x256xf32>
    %c0_81 = arith.constant 0 : index
    %c111_82 = arith.constant 111 : index
    %93 = vector.load %arg10[%c0_81, %c111_82] : memref<4x512xbf16, #tpu.memory_space<vmem>>, vector<4x256xbf16>
    %c0_83 = arith.constant 0 : index
    %c0_84 = arith.constant 0 : index
    %c0_85 = arith.constant 0 : index
    %94 = vector.load %arg4[%c0_83, %c0_84, %c0_85] : memref<9x4x4xbf16, #tpu.memory_space<vmem>>, vector<1x4x4xbf16>
    %95 = vector.shape_cast %94 : vector<1x4x4xbf16> to vector<4x4xbf16>
    %cst_86 = arith.constant dense<0.000000e+00> : vector<4x256xf32>
    %96 = tpu.matmul %95, %93, %cst_86 {dimension_numbers = #tpu.dot_dimension_numbers<[1], [0], [0], [1], [0, 0, 1, 1], [], []>} : vector<4x4xbf16>, vector<4x256xbf16>, vector<4x256xf32> -> vector<4x256xf32>
    %c0_87 = arith.constant 0 : index
    %c127_88 = arith.constant 127 : index
    %97 = vector.load %arg10[%c0_87, %c127_88] : memref<4x512xbf16, #tpu.memory_space<vmem>>, vector<4x256xbf16>
    %c3_89 = arith.constant 3 : index
    %c0_90 = arith.constant 0 : index
    %c0_91 = arith.constant 0 : index
    %98 = vector.load %arg4[%c3_89, %c0_90, %c0_91] : memref<9x4x4xbf16, #tpu.memory_space<vmem>>, vector<1x4x4xbf16>
    %99 = vector.shape_cast %98 : vector<1x4x4xbf16> to vector<4x4xbf16>
    %cst_92 = arith.constant dense<0.000000e+00> : vector<4x256xf32>
    %100 = tpu.matmul %99, %97, %cst_92 {dimension_numbers = #tpu.dot_dimension_numbers<[1], [0], [0], [1], [0, 0, 1, 1], [], []>} : vector<4x4xbf16>, vector<4x256xbf16>, vector<4x256xf32> -> vector<4x256xf32>
    %101 = arith.addf %96, %100 : vector<4x256xf32>
    %c0_93 = arith.constant 0 : index
    %c143_94 = arith.constant 143 : index
    %102 = vector.load %arg10[%c0_93, %c143_94] : memref<4x512xbf16, #tpu.memory_space<vmem>>, vector<4x256xbf16>
    %c6_95 = arith.constant 6 : index
    %c0_96 = arith.constant 0 : index
    %c0_97 = arith.constant 0 : index
    %103 = vector.load %arg4[%c6_95, %c0_96, %c0_97] : memref<9x4x4xbf16, #tpu.memory_space<vmem>>, vector<1x4x4xbf16>
    %104 = vector.shape_cast %103 : vector<1x4x4xbf16> to vector<4x4xbf16>
    %cst_98 = arith.constant dense<0.000000e+00> : vector<4x256xf32>
    %105 = tpu.matmul %104, %102, %cst_98 {dimension_numbers = #tpu.dot_dimension_numbers<[1], [0], [0], [1], [0, 0, 1, 1], [], []>} : vector<4x4xbf16>, vector<4x256xbf16>, vector<4x256xf32> -> vector<4x256xf32>
    %106 = arith.addf %101, %105 : vector<4x256xf32>
    %c0_99 = arith.constant 0 : index
    %c113_100 = arith.constant 113 : index
    %107 = vector.load %arg10[%c0_99, %c113_100] : memref<4x512xbf16, #tpu.memory_space<vmem>>, vector<4x256xbf16>
    %c2_101 = arith.constant 2 : index
    %c0_102 = arith.constant 0 : index
    %c0_103 = arith.constant 0 : index
    %108 = vector.load %arg4[%c2_101, %c0_102, %c0_103] : memref<9x4x4xbf16, #tpu.memory_space<vmem>>, vector<1x4x4xbf16>
    %109 = vector.shape_cast %108 : vector<1x4x4xbf16> to vector<4x4xbf16>
    %cst_104 = arith.constant dense<0.000000e+00> : vector<4x256xf32>
    %110 = tpu.matmul %109, %107, %cst_104 {dimension_numbers = #tpu.dot_dimension_numbers<[1], [0], [0], [1], [0, 0, 1, 1], [], []>} : vector<4x4xbf16>, vector<4x256xbf16>, vector<4x256xf32> -> vector<4x256xf32>
    %c0_105 = arith.constant 0 : index
    %c129_106 = arith.constant 129 : index
    %111 = vector.load %arg10[%c0_105, %c129_106] : memref<4x512xbf16, #tpu.memory_space<vmem>>, vector<4x256xbf16>
    %c5_107 = arith.constant 5 : index
    %c0_108 = arith.constant 0 : index
    %c0_109 = arith.constant 0 : index
    %112 = vector.load %arg4[%c5_107, %c0_108, %c0_109] : memref<9x4x4xbf16, #tpu.memory_space<vmem>>, vector<1x4x4xbf16>
    %113 = vector.shape_cast %112 : vector<1x4x4xbf16> to vector<4x4xbf16>
    %cst_110 = arith.constant dense<0.000000e+00> : vector<4x256xf32>
    %114 = tpu.matmul %113, %111, %cst_110 {dimension_numbers = #tpu.dot_dimension_numbers<[1], [0], [0], [1], [0, 0, 1, 1], [], []>} : vector<4x4xbf16>, vector<4x256xbf16>, vector<4x256xf32> -> vector<4x256xf32>
    %115 = arith.addf %110, %114 : vector<4x256xf32>
    %c0_111 = arith.constant 0 : index
    %c145_112 = arith.constant 145 : index
    %116 = vector.load %arg10[%c0_111, %c145_112] : memref<4x512xbf16, #tpu.memory_space<vmem>>, vector<4x256xbf16>
    %c8_113 = arith.constant 8 : index
    %c0_114 = arith.constant 0 : index
    %c0_115 = arith.constant 0 : index
    %117 = vector.load %arg4[%c8_113, %c0_114, %c0_115] : memref<9x4x4xbf16, #tpu.memory_space<vmem>>, vector<1x4x4xbf16>
    %118 = vector.shape_cast %117 : vector<1x4x4xbf16> to vector<4x4xbf16>
    %cst_116 = arith.constant dense<0.000000e+00> : vector<4x256xf32>
    %119 = tpu.matmul %118, %116, %cst_116 {dimension_numbers = #tpu.dot_dimension_numbers<[1], [0], [0], [1], [0, 0, 1, 1], [], []>} : vector<4x4xbf16>, vector<4x256xbf16>, vector<4x256xf32> -> vector<4x256xf32>
    %120 = arith.addf %115, %119 : vector<4x256xf32>
    %c0_117 = arith.constant 0 : index
    %c0_118 = arith.constant 0 : index
    %121 = vector.load %arg6[%c0_117, %c0_118] : memref<1x256xf32, #tpu.memory_space<vmem>>, vector<1x256xf32>
    %122 = vector.broadcast %121 : vector<1x256xf32> to vector<4x256xf32>
    %123 = arith.mulf %122, %106 : vector<4x256xf32>
    %124 = arith.addf %92, %123 : vector<4x256xf32>
    %c0_119 = arith.constant 0 : index
    %c0_120 = arith.constant 0 : index
    %125 = vector.load %arg7[%c0_119, %c0_120] : memref<1x256xf32, #tpu.memory_space<vmem>>, vector<1x256xf32>
    %126 = vector.broadcast %125 : vector<1x256xf32> to vector<4x256xf32>
    %127 = arith.mulf %126, %120 : vector<4x256xf32>
    %128 = arith.addf %124, %127 : vector<4x256xf32>
    %c0_121 = arith.constant 0 : index
    %c0_122 = arith.constant 0 : index
    %129 = vector.load %arg5[%c0_121, %c0_122] : memref<4x1xf32, #tpu.memory_space<vmem>>, vector<4x1xf32>
    %130 = vector.broadcast %129 : vector<4x1xf32> to vector<4x256xf32>
    %131 = arith.addf %128, %130 : vector<4x256xf32>
    %cst_123 = arith.constant 5.000000e-01 : f32
    %132 = vector.broadcast %cst_123 : f32 to vector<4x256xf32>
    %133 = arith.mulf %132, %131 : vector<4x256xf32>
    %134 = arith.mulf %131, %131 : vector<4x256xf32>
    %135 = arith.mulf %134, %131 : vector<4x256xf32>
    %cst_124 = arith.constant 4.471500e-02 : f32
    %136 = vector.broadcast %cst_124 : f32 to vector<4x256xf32>
    %137 = arith.mulf %136, %135 : vector<4x256xf32>
    %138 = arith.addf %131, %137 : vector<4x256xf32>
    %cst_125 = arith.constant 0.797884583 : f32
    %139 = vector.broadcast %cst_125 : f32 to vector<4x256xf32>
    %140 = arith.mulf %139, %138 : vector<4x256xf32>
    %141 = math.tanh %140 : vector<4x256xf32>
    %cst_126 = arith.constant 1.000000e+00 : f32
    %142 = vector.broadcast %cst_126 : f32 to vector<4x256xf32>
    %143 = arith.addf %142, %141 : vector<4x256xf32>
    %144 = arith.mulf %133, %143 : vector<4x256xf32>
    %c0_127 = arith.constant 0 : index
    %c0_128 = arith.constant 0 : index
    %c0_129 = arith.constant 0 : index
    %145 = vector.load %arg1[%c0_127, %c0_128, %c0_129] : memref<1x4x256xbf16, #tpu.memory_space<vmem>>, vector<1x4x256xbf16>
    %146 = vector.shape_cast %145 : vector<1x4x256xbf16> to vector<4x256xbf16>
    %147 = arith.extf %146 : vector<4x256xbf16> to vector<4x256xf32>
    %148 = arith.addf %147, %144 : vector<4x256xf32>
    %cst_130 = arith.constant 1.414000e+00 : f32
    %149 = vector.broadcast %cst_130 : f32 to vector<4x256xf32>
    %150 = arith.divf %148, %149 : vector<4x256xf32>
    %151 = vector.shape_cast %150 : vector<4x256xf32> to vector<1x4x256xf32>
    %c0_131 = arith.constant 0 : index
    %c0_132 = arith.constant 0 : index
    %c0_133 = arith.constant 0 : index
    %152 = vector.load %arg8[%c0_131, %c0_132, %c0_133] : memref<1x4x256xf32, #tpu.memory_space<vmem>>, vector<1x4x256xf32>
    tpu.vector_store %arg8[%c0_131, %c0_132, %c0_133], %151 {strides = array<i32>} : memref<1x4x256xf32, #tpu.memory_space<vmem>>, vector<1x4x256xf32>,
    return
  }
  func.func @transform_0(%arg0: i32) -> (i32, i32, i32) {
    %c0_i32 = arith.constant 0 : i32
    %c0_i32_0 = arith.constant 0 : i32
    %c0_i32_1 = arith.constant 0 : i32
    return %arg0, %c0_i32, %c0_i32_0 : i32, i32, i32
  }
  func.func @transform_1(%arg0: i32) -> (i32, i32, i32) {
    %c0_i32 = arith.constant 0 : i32
    %c0_i32_0 = arith.constant 0 : i32
    %c0_i32_1 = arith.constant 0 : i32
    %c0_i32_2 = arith.constant 0 : i32
    return %c0_i32, %c0_i32_0, %c0_i32_1 : i32, i32, i32
  }
  func.func @transform_2(%arg0: i32) -> (i32, i32) {
    %c0_i32 = arith.constant 0 : i32
    %c0_i32_0 = arith.constant 0 : i32
    %c0_i32_1 = arith.constant 0 : i32
    return %c0_i32, %c0_i32_0 : i32, i32
  }
  func.func @transform_3(%arg0: i32) -> (i32, i32, i32) {
    %c0_i32 = arith.constant 0 : i32
    %c0_i32_0 = arith.constant 0 : i32
    %c0_i32_1 = arith.constant 0 : i32
    %c0_i32_2 = arith.constant 0 : i32
    return %c0_i32, %c0_i32_0, %c0_i32_1 : i32, i32, i32
  }
  func.func @transform_4(%arg0: i32) -> (i32, i32) {
    %c0_i32 = arith.constant 0 : i32
    %c0_i32_0 = arith.constant 0 : i32
    %c0_i32_1 = arith.constant 0 : i32
    return %c0_i32, %c0_i32_0 : i32, i32
  }
  func.func @transform_5(%arg0: i32) -> (i32, i32) {
    %c0_i32 = arith.constant 0 : i32
    %c0_i32_0 = arith.constant 0 : i32
    %c0_i32_1 = arith.constant 0 : i32
    return %c0_i32, %c0_i32_0 : i32, i32
  }
  func.func @transform_6(%arg0: i32) -> (i32, i32) {
    %c0_i32 = arith.constant 0 : i32
    %c0_i32_0 = arith.constant 0 : i32
    %c0_i32_1 = arith.constant 0 : i32
    return %c0_i32, %c0_i32_0 : i32, i32
  }
  func.func @transform_7(%arg0: i32) -> (i32, i32, i32) {
    %c0_i32 = arith.constant 0 : i32
    %c0_i32_0 = arith.constant 0 : i32
    %c0_i32_1 = arith.constant 0 : i32
    return %arg0, %c0_i32, %c0_i32_0 : i32, i32, i32
  }
}

</mosaic_0001>

<llo_original>
// kernel: tpu_custom_call.1
$region0: #{tpu_custom_call.1}
  #allocation0 [shape = 'u32[]', space=smem, size = 0x4, offset = 0x4, fixed_abs, tag = 'smem constant byte address 0x4 - core index']
  #allocation1 [shape = 'u32[144,128]{1,0:T(1,128)}', space=vmem, size = 0x12000, scoped, tag = 'internal scratch']
  #allocation2 [shape = 'bf16[4,512]{1,0:T(4,128)(2,1)}', space=vmem, size = 0x1000, scoped, tag = 'scratch operand']
  #allocation3 [shape = 'bf16[4,512]{1,0:T(4,128)(2,1)}', space=vmem, size = 0x1000, scoped, tag = 'scratch operand']
  %s0 = inlined_call_operand.vmem [shape: bf16[2,4,256], index: 0, kind: input, shape index: {}]
  %s1 = inlined_call_operand.vmem [shape: bf16[9,4,4], index: 1, kind: input, shape index: {}]
  %s2 = inlined_call_operand.vmem [shape: f32[4,1], index: 2, kind: input, shape index: {}]
  %s3 = inlined_call_operand.vmem [shape: bf16[9,4,4], index: 3, kind: input, shape index: {}]
  %s4 = inlined_call_operand.vmem [shape: f32[4,1], index: 4, kind: input, shape index: {}]
  %s5 = inlined_call_operand.vmem [shape: f32[1,256], index: 5, kind: input, shape index: {}]
  %s6 = inlined_call_operand.vmem [shape: f32[1,256], index: 6, kind: input, shape index: {}]
  %s7 = inlined_call_operand.hbm [shape: f32[2,4,256], index: 7, kind: output, shape index: {}]
  %s8 = sld [smem:[#allocation0]]
  $region61: #{tpu_custom_call.1} parent=0
    _
  %s10 = ssub.s32 1, %s8
  %s11 = scalar_select 0, %s10, %s8
  $region1: #{tpu_custom_call.1} parent=0
    #allocation4 [shape = 'u8[8192]{0}', space=vmem, size = 0x2000, scoped, tag = 'output window, operand 0']
    #allocation5 [shape = 's32[2]{0}', space=sflag, size = 0x8, scoped, tag = 'scoped memory for tpu_custom_call.1']
    %12 = vsyncpa [#allocation5], 0
    %s13 = scalar_lea.sflag [#allocation5], 1
    %14 = vsyncpa %s13, 0
    loop: start=0, step=1, limit=4
    $region2: #{tpu_custom_call.1} parent=1 // loop_pre_header
      _
    $region3: #{tpu_custom_call.1} parent=1 // loop_header
      %s16 = sphi 0, %s20
      %p17 = scmp.ge.s32.totalorder %s16, 4
      %s26 = sphi 0, %s28
      %s29 = sphi 0, %s26
      %s30 = sphi 0, %s29
      %s46 = sphi 0, %s30
      %s50 = sphi 0, %s50
      %s52 = sphi 0, %s50
      %s53 = sphi 0, %s52
      %s67 = sphi 0, %s53
      %s71 = sphi 0, %s71
      %s73 = sphi 0, %s71
      %s74 = sphi 0, %s73
      %s88 = sphi 0, %s74
      %s92 = sphi 0, %s92
      %s94 = sphi 0, %s92
      %s95 = sphi 0, %s94
      %s109 = sphi 0, %s95
      %s113 = sphi 0, %s113
      %s115 = sphi 0, %s113
      %s116 = sphi 0, %s115
      %s130 = sphi 0, %s116
      %s134 = sphi 0, %s134
      %s136 = sphi 0, %s134
      %s137 = sphi 0, %s136
      %s151 = sphi 0, %s137
      %s155 = sphi 0, %s155
      %s157 = sphi 0, %s155
      %s158 = sphi 0, %s157
      %s172 = sphi 0, %s158
      %s178 = sphi 0, %s180
      %s181 = sphi 0, %s178
      %s182 = sphi 0, %s181
      %s198 = sphi 0, %s182
    $region4: #{tpu_custom_call.1} parent=1 // loop_header_branch
      %19 = sbr.rel (%p17) target = $region8
    $region5: #{tpu_custom_call.1} parent=1 // loop_body
      %s21 = ssub.s32 %s16, 1
      %s22 = ssub.s32 %s16, 2
      %s23 = sadd.s32 %s16, 1
      %s24 = ssub.s32 %s16, %s23
      %p25 = scmp.eq.s32.totalorder %s24, 0
      %s27 = sadd.s32 %s26, 1
      %s28 = scalar_select %p25, %s26, %s27
      %p31 = pneg %p25
      %p32 = scmp.eq.s32.totalorder %s16, 1
      %p33 = por %p31, %p32
      %p34 = scmp.ne.s32.totalorder %s26, %s29
      %p35 = scmp.eq.s32.totalorder %s16, 0
      %p36 = por %p34, %p35
      %p37 = scmp.ne.s32.totalorder %s26, %s29
      %p38 = scmp.eq.s32.totalorder %s21, 1
      %p39 = por %p37, %p38
      %p40 = scmp.ne.s32.totalorder %s29, %s30
      %p41 = scmp.eq.s32.totalorder %s21, 0
      %p42 = por %p40, %p41
      %p43 = scmp.ne.s32.totalorder %s29, %s30
      %p44 = scmp.eq.s32.totalorder %s22, 1
      %p45 = por %p43, %p44
      %p47 = scmp.ne.s32.totalorder %s30, %s46
      %p48 = scmp.eq.s32.totalorder %s22, 0
      %p49 = por %p47, %p48
      %s51 = sadd.s32 %s50, 1
      %p54 = scmp.eq.s32.totalorder %s16, 1
      %p55 = scmp.ne.s32.totalorder %s50, %s52
      %p56 = scmp.eq.s32.totalorder %s16, 0
      %p57 = por %p55, %p56
      %p58 = scmp.ne.s32.totalorder %s50, %s52
      %p59 = scmp.eq.s32.totalorder %s21, 1
      %p60 = por %p58, %p59
      %p61 = scmp.ne.s32.totalorder %s52, %s53
      %p62 = scmp.eq.s32.totalorder %s21, 0
      %p63 = por %p61, %p62
      %p64 = scmp.ne.s32.totalorder %s52, %s53
      %p65 = scmp.eq.s32.totalorder %s22, 1
      %p66 = por %p64, %p65
      %p68 = scmp.ne.s32.totalorder %s53, %s67
      %p69 = scmp.eq.s32.totalorder %s22, 0
      %p70 = por %p68, %p69
      %s72 = sadd.s32 %s71, 1
      %p75 = scmp.eq.s32.totalorder %s16, 1
      %p76 = scmp.ne.s32.totalorder %s71, %s73
      %p77 = scmp.eq.s32.totalorder %s16, 0
      %p78 = por %p76, %p77
      %p79 = scmp.ne.s32.totalorder %s71, %s73
      %p80 = scmp.eq.s32.totalorder %s21, 1
      %p81 = por %p79, %p80
      %p82 = scmp.ne.s32.totalorder %s73, %s74
      %p83 = scmp.eq.s32.totalorder %s21, 0
      %p84 = por %p82, %p83
      %p85 = scmp.ne.s32.totalorder %s73, %s74
      %p86 = scmp.eq.s32.totalorder %s22, 1
      %p87 = por %p85, %p86
      %p89 = scmp.ne.s32.totalorder %s74, %s88
      %p90 = scmp.eq.s32.totalorder %s22, 0
      %p91 = por %p89, %p90
      %s93 = sadd.s32 %s92, 1
      %p96 = scmp.eq.s32.totalorder %s16, 1
      %p97 = scmp.ne.s32.totalorder %s92, %s94
      %p98 = scmp.eq.s32.totalorder %s16, 0
      %p99 = por %p97, %p98
      %p100 = scmp.ne.s32.totalorder %s92, %s94
      %p101 = scmp.eq.s32.totalorder %s21, 1
      %p102 = por %p100, %p101
      %p103 = scmp.ne.s32.totalorder %s94, %s95
      %p104 = scmp.eq.s32.totalorder %s21, 0
      %p105 = por %p103, %p104
      %p106 = scmp.ne.s32.totalorder %s94, %s95
      %p107 = scmp.eq.s32.totalorder %s22, 1
      %p108 = por %p106, %p107
      %p110 = scmp.ne.s32.totalorder %s95, %s109
      %p111 = scmp.eq.s32.totalorder %s22, 0
      %p112 = por %p110, %p111
      %s114 = sadd.s32 %s113, 1
      %p117 = scmp.eq.s32.totalorder %s16, 1
      %p118 = scmp.ne.s32.totalorder %s113, %s115
      %p119 = scmp.eq.s32.totalorder %s16, 0
      %p120 = por %p118, %p119
      %p121 = scmp.ne.s32.totalorder %s113, %s115
      %p122 = scmp.eq.s32.totalorder %s21, 1
      %p123 = por %p121, %p122
      %p124 = scmp.ne.s32.totalorder %s115, %s116
      %p125 = scmp.eq.s32.totalorder %s21, 0
      %p126 = por %p124, %p125
      %p127 = scmp.ne.s32.totalorder %s115, %s116
      %p128 = scmp.eq.s32.totalorder %s22, 1
      %p129 = por %p127, %p128
      %p131 = scmp.ne.s32.totalorder %s116, %s130
      %p132 = scmp.eq.s32.totalorder %s22, 0
      %p133 = por %p131, %p132
      %s135 = sadd.s32 %s134, 1
      %p138 = scmp.eq.s32.totalorder %s16, 1
      %p139 = scmp.ne.s32.totalorder %s134, %s136
      %p140 = scmp.eq.s32.totalorder %s16, 0
      %p141 = por %p139, %p140
      %p142 = scmp.ne.s32.totalorder %s134, %s136
      %p143 = scmp.eq.s32.totalorder %s21, 1
      %p144 = por %p142, %p143
      %p145 = scmp.ne.s32.totalorder %s136, %s137
      %p146 = scmp.eq.s32.totalorder %s21, 0
      %p147 = por %p145, %p146
      %p148 = scmp.ne.s32.totalorder %s136, %s137
      %p149 = scmp.eq.s32.totalorder %s22, 1
      %p150 = por %p148, %p149
      %p152 = scmp.ne.s32.totalorder %s137, %s151
      %p153 = scmp.eq.s32.totalorder %s22, 0
      %p154 = por %p152, %p153
      %s156 = sadd.s32 %s155, 1
      %p159 = scmp.eq.s32.totalorder %s16, 1
      %p160 = scmp.ne.s32.totalorder %s155, %s157
      %p161 = scmp.eq.s32.totalorder %s16, 0
      %p162 = por %p160, %p161
      %p163 = scmp.ne.s32.totalorder %s155, %s157
      %p164 = scmp.eq.s32.totalorder %s21, 1
      %p165 = por %p163, %p164
      %p166 = scmp.ne.s32.totalorder %s157, %s158
      %p167 = scmp.eq.s32.totalorder %s21, 0
      %p168 = por %p166, %p167
      %p169 = scmp.ne.s32.totalorder %s157, %s158
      %p170 = scmp.eq.s32.totalorder %s22, 1
      %p171 = por %p169, %p170
      %p173 = scmp.ne.s32.totalorder %s158, %s172
      %p174 = scmp.eq.s32.totalorder %s22, 0
      %p175 = por %p173, %p174
      %s176 = ssub.s32 %s16, %s23
      %p177 = scmp.eq.s32.totalorder %s176, 0
      %s179 = sadd.s32 %s178, 1
      %s180 = scalar_select %p177, %s178, %s179
      %p183 = pneg %p177
      %p184 = scmp.eq.s32.totalorder %s16, 1
      %p185 = por %p183, %p184
      %p186 = scmp.ne.s32.totalorder %s178, %s181
      %p187 = scmp.eq.s32.totalorder %s16, 0
      %p188 = por %p186, %p187
      %p189 = scmp.ne.s32.totalorder %s178, %s181
      %p190 = scmp.eq.s32.totalorder %s21, 1
      %p191 = por %p189, %p190
      %p192 = scmp.ne.s32.totalorder %s181, %s182
      %p193 = scmp.eq.s32.totalorder %s21, 0
      %p194 = por %p192, %p193
      %p195 = scmp.ne.s32.totalorder %s181, %s182
      %p196 = scmp.eq.s32.totalorder %s22, 1
      %p197 = por %p195, %p196
      %p199 = scmp.ne.s32.totalorder %s182, %s198
      %p200 = scmp.eq.s32.totalorder %s22, 0
      %p201 = por %p199, %p200
      %p202 = scmp.le.s32.totalorder 1, %s16
      %p203 = scmp.lt.s32.totalorder %s16, 3
      %p204 = pnand %p202, %p203
      %p205 = pneg %p204
      // Predicated region
      $region9: #{tpu_custom_call.1} parent=5 // pred_check
        _
      $region10: #{tpu_custom_call.1} parent=5 // pred_check_branch
        %207 = sbr.rel (%p204) target = $region12
      $region11: #{tpu_custom_call.1} parent=5 // pred_region
        %s208 = ssub.s32 %s16, 1
        // Predicated region
        $region13: #{tpu_custom_call.1} parent=11 // pred_check
          %p209 = pneg %p63
        $region14: #{tpu_custom_call.1} parent=11 // pred_check_branch
          %211 = sbr.rel (%p209) target = $region16
        $region15: #{tpu_custom_call.1} parent=11 // pred_region
          _
        $region16: #{tpu_custom_call.1} parent=11 // pred_fallthru
          _
        // Predicated region
        $region17: #{tpu_custom_call.1} parent=11 // pred_check
          %p212 = pneg %p84
        $region18: #{tpu_custom_call.1} parent=11 // pred_check_branch
          %214 = sbr.rel (%p212) target = $region20
        $region19: #{tpu_custom_call.1} parent=11 // pred_region
          _
        $region20: #{tpu_custom_call.1} parent=11 // pred_fallthru
          _
        // Predicated region
        $region21: #{tpu_custom_call.1} parent=11 // pred_check
          %p215 = pneg %p105
        $region22: #{tpu_custom_call.1} parent=11 // pred_check_branch
          %217 = sbr.rel (%p215) target = $region24
        $region23: #{tpu_custom_call.1} parent=11 // pred_region
          _
        $region24: #{tpu_custom_call.1} parent=11 // pred_fallthru
          _
        // Predicated region
        $region25: #{tpu_custom_call.1} parent=11 // pred_check
          %p218 = pneg %p126
        $region26: #{tpu_custom_call.1} parent=11 // pred_check_branch
          %220 = sbr.rel (%p218) target = $region28
        $region27: #{tpu_custom_call.1} parent=11 // pred_region
          _
        $region28: #{tpu_custom_call.1} parent=11 // pred_fallthru
          _
        // Predicated region
        $region29: #{tpu_custom_call.1} parent=11 // pred_check
          %p221 = pneg %p147
        $region30: #{tpu_custom_call.1} parent=11 // pred_check_branch
          %223 = sbr.rel (%p221) target = $region32
        $region31: #{tpu_custom_call.1} parent=11 // pred_region
          _
        $region32: #{tpu_custom_call.1} parent=11 // pred_fallthru
          _
        // Predicated region
        $region33: #{tpu_custom_call.1} parent=11 // pred_check
          %p224 = pneg %p168
        $region34: #{tpu_custom_call.1} parent=11 // pred_check_branch
          %226 = sbr.rel (%p224) target = $region36
        $region35: #{tpu_custom_call.1} parent=11 // pred_region
          _
        $region36: #{tpu_custom_call.1} parent=11 // pred_fallthru
          _
      $region12: #{tpu_custom_call.1} parent=5 // pred_fallthru
        _
      %p227 = scmp.lt.s32.totalorder %s16, 2
      // Predicated region
      $region37: #{tpu_custom_call.1} parent=5 // pred_check
        %p228 = pneg %p227
      $region38: #{tpu_custom_call.1} parent=5 // pred_check_branch
        %230 = sbr.rel (%p228) target = $region40
      $region39: #{tpu_custom_call.1} parent=5 // pred_region
        // Predicated region
        $region41: #{tpu_custom_call.1} parent=39 // pred_check
          %p231 = pneg %p36
        $region42: #{tpu_custom_call.1} parent=39 // pred_check_branch
          %233 = sbr.rel (%p231) target = $region44
        $region43: #{tpu_custom_call.1} parent=39 // pred_region
          %p234 = scmp.lt.s32.totalorder %s16, 1
          %s235 = scalar_select %p234, %s16, 1
          %s236 = smul.addr %s235, 2
          %s237 = smul.addr %s236, 2
          %s238 = scalar_lea.vmem %s0, %s237
        $region44: #{tpu_custom_call.1} parent=39 // pred_fallthru
          _
      $region40: #{tpu_custom_call.1} parent=5 // pred_fallthru
        _
      %p239 = scmp.le.s32.totalorder 1, %s16
      %p240 = scmp.lt.s32.totalorder %s16, 3
      %p241 = pnand %p239, %p240
      %p242 = pneg %p241
      // Predicated region
      $region45: #{tpu_custom_call.1} parent=5 // pred_check
        _
      $region46: #{tpu_custom_call.1} parent=5 // pred_check_branch
        %244 = sbr.rel (%p241) target = $region48
      $region47: #{tpu_custom_call.1} parent=5 // pred_region
        %s245 = ssub.s32 %s16, 1
        %p246 = scmp.lt.s32.totalorder %s21, 1
        %s247 = scalar_select %p246, %s21, 1
        %s248 = smul.addr %s247, 2
        %s249 = smul.addr %s248, 2
        %s250 = scalar_lea.vmem %s0, %s249
        %p251 = pneg %p42
        %p252 = pneg %p39
        %p253 = pneg %p63
        %p254 = pneg %p60
        %p255 = pneg %p84
        %p256 = pneg %p81
        %p257 = pneg %p105
        %p258 = pneg %p102
        %p259 = pneg %p126
        %p260 = pneg %p123
        %p261 = pneg %p147
        %p262 = pneg %p144
        %p263 = pneg %p168
        %p264 = pneg %p165
        %p265 = pneg %p194
        %p266 = pneg %p191
        %s267 = sand.u32 %s181, 1
        %s268 = scalar_lea.sflag [#allocation5], %s267
        %s269 = sand.u32 %s181, 1
        %s270 = smul.addr %s269, 8
        %s271 = scalar_lea.vmem [#allocation4], %s270
        %p272 = scmp.lt.s32.totalorder %s21, 1
        %s273 = scalar_select %p272, %s21, 1
        %s274 = smul.addr %s273, 2
        %s275 = smul.addr %s274, 2
        %s276 = scalar_lea.vmem %s0, %s275
        %278 = vst [vmem:[#allocation2] sm:$0x3] 0
        %279 = vst [vmem:[#allocation2 + $0x6] sm:$0x3] 0
        %280 = vst [vmem:[#allocation3] sm:$0x3] 0
        %281 = vst [vmem:[#allocation3 + $0x6] sm:$0x3] 0
        %v282 = vld [vmem:[%s276] sm:$0xf]
        %283 = vst [vmem:[#allocation2 + $0x2] sm:$0xf] %v282
        %v284 = vld [vmem:[#allocation2] sm:$0x3f]
        %s285 = scalar_lea.vmem %s1, 2
        %v286 = vld [vmem:[%s285] sm:$0x3]
        %v287 = vld [vmem:[#allocation2 + $0x2] sm:$0xf]
        %s288 = scalar_lea.vmem %s1, 8
        %v289 = vld [vmem:[%s288] sm:$0x3]
        %v292 = vunpack.c.l.s4 1983009808
        %v293 = vunpack.c.0.s8 %v292
        %v294 = vlaneseq
        %v295 = vshrl.u32 %v294, 7
        %v296 = vsub.s32 %v293, %v295
        %v297 = vrot.slane %v287, %v296
        %v298 = vcombine.high %v297, %v297
        %vm299 = vcmask 31744
        %v301 = vsel %vm299, %v289, 0
        %vm303 = vcmask 1041408
        %v305 = vsel %vm303, %v297, 0
        %v308 = vsel %vm303, %v298, 0
        %310 = vmatprep.subr.bf16.mxu0 %v308
        %311 = vmatpush1.bf16.msra.mxu0 %v305
        %312 = vmatprep.subr.bf16.mxu0 0
        %313 = vmatpush1.bf16.msra.mxu0 0
        %314 = vmatprep.subr.bf16.mxu0 0
        %315 = vmatpush1.bf16.msra.mxu0 0
        %316 = vmatprep.subr.bf16.mxu0 0
        %317 = vmatpush1.bf16.msra.mxu0 0
        %318 = vmatprep.subr.bf16.mxu0 0
        %319 = vmatpush1.bf16.msra.mxu0 0
        %320 = vmatprep.subr.bf16.mxu0 0
        %321 = vmatpush1.bf16.msra.mxu0 0
        %322 = vmatprep.subr.bf16.mxu0 0
        %323 = vmatpush1.bf16.msra.mxu0 0
        %324 = vmatprep.subr.bf16.mxu0 0
        %325 = vmatpush1.bf16.msra.mxu0 0
        %326 = vmatprep.subr.bf16.mxu0 0
        %327 = vmatpush1.bf16.msra.mxu0 0
        %328 = vmatprep.subr.bf16.mxu0 0
        %329 = vmatpush1.bf16.msra.mxu0 0
        %330 = vmatprep.subr.bf16.mxu0 0
        %331 = vmatpush1.bf16.msra.mxu0 0
        %332 = vmatprep.subr.bf16.mxu0 0
        %333 = vmatpush1.bf16.msra.mxu0 0
        %334 = vmatprep.subr.bf16.mxu0 0
        %335 = vmatpush1.bf16.msra.mxu0 0
        %336 = vmatprep.subr.bf16.mxu0 0
        %337 = vmatpush1.bf16.msra.mxu0 0
        %338 = vmatprep.subr.bf16.mxu0 0
        %339 = vmatpush1.bf16.msra.mxu0 0
        %340 = vmatprep.subr.bf16.mxu0 0
        %341 = vmatpush1.bf16.msra.mxu0 0
        %342 = vmatprep.mubr.bf16.mxu0 0
        %343 = vmatmul.mubr.bf16.gmra.mrb[0].mxu0 %v301
        %v344 = vpop.f32.mrb[0].mxu0
        %v345 = vadd.f32 0.0, %v344
        %v346 = vpop.f32.mrb[0].mxu0
        %v347 = vadd.f32 0.0, %v346
        %v348 = vpop.f32.mrb[0].mxu0
        %v349 = vpop.f32.mrb[0].mxu0
        %350 = vdwg.mxu0
        %v352 = vcombine.high %v284, %v284
        %v354 = vunpack.c.l.s4 1983009808
        %v355 = vunpack.c.0.s8 %v354
        %v356 = vlaneseq
        %v357 = vshrl.u32 %v356, 7
        %v358 = vsub.s32 %v355, %v357
        %v359 = vrot.slane %v284, %v358
        %v361 = vunpack.c.l.s4 1983009808
        %v362 = vunpack.c.0.s8 %v361
        %v363 = vlaneseq
        %v364 = vshrl.u32 %v363, 7
        %v365 = vsub.s32 %v362, %v364
        %v366 = vrot.slane %v352, %v365
        %v367 = vcombine.high %v359, %v359
        %368 = vrot.lane.b32.xlu0 %v359, 16
        %v369 = vpop.permute.xlu0 %368
        %370 = vrot.lane.b32.xlu0 %v367, 16
        %v371 = vpop.permute.xlu0 %370
        %372 = vrot.lane.b32.xlu0 %v366, 16
        %v373 = vpop.permute.xlu0 %372
        %vm374 = vcmask 130048
        %v375 = vsel %vm374, %v369, %v371
        %v376 = vsel %vm374, %v371, %v373
        %v378 = vsel %vm299, %v286, 0
        %v381 = vsel %vm303, %v375, 0
        %v384 = vsel %vm303, %v376, 0
        %386 = vmatprep.subr.bf16.mxu0 %v384
        %387 = vmatpush1.bf16.msra.mxu0 %v381
        %388 = vmatprep.subr.bf16.mxu0 0
        %389 = vmatpush1.bf16.msra.mxu0 0
        %390 = vmatprep.subr.bf16.mxu0 0
        %391 = vmatpush1.bf16.msra.mxu0 0
        %392 = vmatprep.subr.bf16.mxu0 0
        %393 = vmatpush1.bf16.msra.mxu0 0
        %394 = vmatprep.subr.bf16.mxu0 0
        %395 = vmatpush1.bf16.msra.mxu0 0
        %396 = vmatprep.subr.bf16.mxu0 0
        %397 = vmatpush1.bf16.msra.mxu0 0
        %398 = vmatprep.subr.bf16.mxu0 0
        %399 = vmatpush1.bf16.msra.mxu0 0
        %400 = vmatprep.subr.bf16.mxu0 0
        %401 = vmatpush1.bf16.msra.mxu0 0
        %402 = vmatprep.subr.bf16.mxu0 0
        %403 = vmatpush1.bf16.msra.mxu0 0
        %404 = vmatprep.subr.bf16.mxu0 0
        %405 = vmatpush1.bf16.msra.mxu0 0
        %406 = vmatprep.subr.bf16.mxu0 0
        %407 = vmatpush1.bf16.msra.mxu0 0
        %408 = vmatprep.subr.bf16.mxu0 0
        %409 = vmatpush1.bf16.msra.mxu0 0
        %410 = vmatprep.subr.bf16.mxu0 0
        %411 = vmatpush1.bf16.msra.mxu0 0
        %412 = vmatprep.subr.bf16.mxu0 0
        %413 = vmatpush1.bf16.msra.mxu0 0
        %414 = vmatprep.subr.bf16.mxu0 0
        %415 = vmatpush1.bf16.msra.mxu0 0
        %416 = vmatprep.subr.bf16.mxu0 0
        %417 = vmatpush1.bf16.msra.mxu0 0
        %418 = vmatprep.mubr.bf16.mxu0 0
        %419 = vmatmul.mubr.bf16.gmra.mrb[0].mxu0 %v378
        %v420 = vpop.f32.mrb[0].mxu0
        %v421 = vadd.f32 %v345, %v420
        %v422 = vpop.f32.mrb[0].mxu0
        %v423 = vadd.f32 %v347, %v422
        %v424 = vpop.f32.mrb[0].mxu0
        %v425 = vpop.f32.mrb[0].mxu0
        %426 = vdwg.mxu0
        %v427 = vld [vmem:[#allocation2 + $0x2] sm:$0x3f]
        %s428 = scalar_lea.vmem %s1, 14
        %v429 = vld [vmem:[%s428] sm:$0x3]
        %v431 = vcombine.high %v427, %v427
        %v433 = vunpack.c.l.s4 1983009808
        %v434 = vunpack.c.0.s8 %v433
        %v435 = vlaneseq
        %v436 = vshrl.u32 %v435, 7
        %v437 = vsub.s32 %v434, %v436
        %v438 = vrot.slane %v427, %v437
        %v440 = vunpack.c.l.s4 1983009808
        %v441 = vunpack.c.0.s8 %v440
        %v442 = vlaneseq
        %v443 = vshrl.u32 %v442, 7
        %v444 = vsub.s32 %v441, %v443
        %v445 = vrot.slane %v431, %v444
        %v446 = vcombine.high %v438, %v438
        %447 = vrot.lane.b32.xlu0 %v438, 112
        %v448 = vpop.permute.xlu0 %447
        %449 = vrot.lane.b32.xlu0 %v446, 112
        %v450 = vpop.permute.xlu0 %449
        %451 = vrot.lane.b32.xlu0 %v445, 112
        %v452 = vpop.permute.xlu0 %451
        %vm453 = vcmask 916480
        %v454 = vsel %vm453, %v448, %v450
        %v455 = vsel %vm453, %v450, %v452
        %v457 = vsel %vm299, %v429, 0
        %v460 = vsel %vm303, %v454, 0
        %v463 = vsel %vm303, %v455, 0
        %465 = vmatprep.subr.bf16.mxu0 %v463
        %466 = vmatpush1.bf16.msra.mxu0 %v460
        %467 = vmatprep.subr.bf16.mxu0 0
        %468 = vmatpush1.bf16.msra.mxu0 0
        %469 = vmatprep.subr.bf16.mxu0 0
        %470 = vmatpush1.bf16.msra.mxu0 0
        %471 = vmatprep.subr.bf16.mxu0 0
        %472 = vmatpush1.bf16.msra.mxu0 0
        %473 = vmatprep.subr.bf16.mxu0 0
        %474 = vmatpush1.bf16.msra.mxu0 0
        %475 = vmatprep.subr.bf16.mxu0 0
        %476 = vmatpush1.bf16.msra.mxu0 0
        %477 = vmatprep.subr.bf16.mxu0 0
        %478 = vmatpush1.bf16.msra.mxu0 0
        %479 = vmatprep.subr.bf16.mxu0 0
        %480 = vmatpush1.bf16.msra.mxu0 0
        %481 = vmatprep.subr.bf16.mxu0 0
        %482 = vmatpush1.bf16.msra.mxu0 0
        %483 = vmatprep.subr.bf16.mxu0 0
        %484 = vmatpush1.bf16.msra.mxu0 0
        %485 = vmatprep.subr.bf16.mxu0 0
        %486 = vmatpush1.bf16.msra.mxu0 0
        %487 = vmatprep.subr.bf16.mxu0 0
        %488 = vmatpush1.bf16.msra.mxu0 0
        %489 = vmatprep.subr.bf16.mxu0 0
        %490 = vmatpush1.bf16.msra.mxu0 0
        %491 = vmatprep.subr.bf16.mxu0 0
        %492 = vmatpush1.bf16.msra.mxu0 0
        %493 = vmatprep.subr.bf16.mxu0 0
        %494 = vmatpush1.bf16.msra.mxu0 0
        %495 = vmatprep.subr.bf16.mxu0 0
        %496 = vmatpush1.bf16.msra.mxu0 0
        %497 = vmatprep.mubr.bf16.mxu0 0
        %498 = vmatmul.mubr.bf16.gmra.mrb[0].mxu0 %v457
        %v499 = vpop.f32.mrb[0].mxu0
        %v500 = vadd.f32 0.0, %v499
        %v501 = vpop.f32.mrb[0].mxu0
        %v502 = vadd.f32 0.0, %v501
        %v503 = vpop.f32.mrb[0].mxu0
        %v504 = vpop.f32.mrb[0].mxu0
        %505 = vdwg.mxu0
        %v506 = vadd.f32 %v421, %v500
        %v507 = vadd.f32 %v423, %v502
        %v508 = vld [vmem:[#allocation2] sm:$0x3f]
        %v509 = vld [vmem:[%s1] sm:$0x3]
        %s510 = scalar_lea.vmem %s1, 6
        %v511 = vld [vmem:[%s510] sm:$0x3]
        %v513 = vcombine.high %v508, %v508
        %v515 = vunpack.c.l.s4 1983009808
        %v516 = vunpack.c.0.s8 %v515
        %v517 = vlaneseq
        %v518 = vshrl.u32 %v517, 7
        %v519 = vsub.s32 %v516, %v518
        %v520 = vrot.slane %v508, %v519
        %v522 = vunpack.c.l.s4 1983009808
        %v523 = vunpack.c.0.s8 %v522
        %v524 = vlaneseq
        %v525 = vshrl.u32 %v524, 7
        %v526 = vsub.s32 %v523, %v525
        %v527 = vrot.slane %v513, %v526
        %v528 = vcombine.high %v520, %v520
        %529 = vrot.lane.b32.xlu0 %v520, 1
        %v530 = vpop.permute.xlu0 %529
        %531 = vrot.lane.b32.xlu0 %v528, 1
        %v532 = vpop.permute.xlu0 %531
        %533 = vrot.lane.b32.xlu0 %v527, 1
        %v534 = vpop.permute.xlu0 %533
        %vm535 = vcmask 7168
        %v536 = vsel %vm535, %v530, %v532
        %v537 = vsel %vm535, %v532, %v534
        %v539 = vsel %vm299, %v511, 0
        %v542 = vsel %vm303, %v536, 0
        %v545 = vsel %vm303, %v537, 0
        %547 = vmatprep.subr.bf16.mxu0 %v545
        %548 = vmatpush1.bf16.msra.mxu0 %v542
        %549 = vmatprep.subr.bf16.mxu0 0
        %550 = vmatpush1.bf16.msra.mxu0 0
        %551 = vmatprep.subr.bf16.mxu0 0
        %552 = vmatpush1.bf16.msra.mxu0 0
        %553 = vmatprep.subr.bf16.mxu0 0
        %554 = vmatpush1.bf16.msra.mxu0 0
        %555 = vmatprep.subr.bf16.mxu0 0
        %556 = vmatpush1.bf16.msra.mxu0 0
        %557 = vmatprep.subr.bf16.mxu0 0
        %558 = vmatpush1.bf16.msra.mxu0 0
        %559 = vmatprep.subr.bf16.mxu0 0
        %560 = vmatpush1.bf16.msra.mxu0 0
        %561 = vmatprep.subr.bf16.mxu0 0
        %562 = vmatpush1.bf16.msra.mxu0 0
        %563 = vmatprep.subr.bf16.mxu0 0
        %564 = vmatpush1.bf16.msra.mxu0 0
        %565 = vmatprep.subr.bf16.mxu0 0
        %566 = vmatpush1.bf16.msra.mxu0 0
        %567 = vmatprep.subr.bf16.mxu0 0
        %568 = vmatpush1.bf16.msra.mxu0 0
        %569 = vmatprep.subr.bf16.mxu0 0
        %570 = vmatpush1.bf16.msra.mxu0 0
        %571 = vmatprep.subr.bf16.mxu0 0
        %572 = vmatpush1.bf16.msra.mxu0 0
        %573 = vmatprep.subr.bf16.mxu0 0
        %574 = vmatpush1.bf16.msra.mxu0 0
        %575 = vmatprep.subr.bf16.mxu0 0
        %576 = vmatpush1.bf16.msra.mxu0 0
        %577 = vmatprep.subr.bf16.mxu0 0
        %578 = vmatpush1.bf16.msra.mxu0 0
        %579 = vmatprep.mubr.bf16.mxu0 0
        %580 = vmatmul.mubr.bf16.gmra.mrb[0].mxu0 %v539
        %v581 = vpop.f32.mrb[0].mxu0
        %v582 = vadd.f32 0.0, %v581
        %v583 = vpop.f32.mrb[0].mxu0
        %v584 = vadd.f32 0.0, %v583
        %v585 = vpop.f32.mrb[0].mxu0
        %v586 = vpop.f32.mrb[0].mxu0
        %587 = vdwg.mxu0
        %588 = vrot.lane.b32.xlu0 %v520, 17
        %v589 = vpop.permute.xlu0 %588
        %590 = vrot.lane.b32.xlu0 %v528, 17
        %v591 = vpop.permute.xlu0 %590
        %592 = vrot.lane.b32.xlu0 %v527, 17
        %v593 = vpop.permute.xlu0 %592
        %vm594 = vcmask 138240
        %v595 = vsel %vm594, %v589, %v591
        %v596 = vsel %vm594, %v591, %v593
        %v598 = vsel %vm299, %v509, 0
        %v601 = vsel %vm303, %v595, 0
        %v604 = vsel %vm303, %v596, 0
        %606 = vmatprep.subr.bf16.mxu0 %v604
        %607 = vmatpush1.bf16.msra.mxu0 %v601
        %608 = vmatprep.subr.bf16.mxu0 0
        %609 = vmatpush1.bf16.msra.mxu0 0
        %610 = vmatprep.subr.bf16.mxu0 0
        %611 = vmatpush1.bf16.msra.mxu0 0
        %612 = vmatprep.subr.bf16.mxu0 0
        %613 = vmatpush1.bf16.msra.mxu0 0
        %614 = vmatprep.subr.bf16.mxu0 0
        %615 = vmatpush1.bf16.msra.mxu0 0
        %616 = vmatprep.subr.bf16.mxu0 0
        %617 = vmatpush1.bf16.msra.mxu0 0
        %618 = vmatprep.subr.bf16.mxu0 0
        %619 = vmatpush1.bf16.msra.mxu0 0
        %620 = vmatprep.subr.bf16.mxu0 0
        %621 = vmatpush1.bf16.msra.mxu0 0
        %622 = vmatprep.subr.bf16.mxu0 0
        %623 = vmatpush1.bf16.msra.mxu0 0
        %624 = vmatprep.subr.bf16.mxu0 0
        %625 = vmatpush1.bf16.msra.mxu0 0
        %626 = vmatprep.subr.bf16.mxu0 0
        %627 = vmatpush1.bf16.msra.mxu0 0
        %628 = vmatprep.subr.bf16.mxu0 0
        %629 = vmatpush1.bf16.msra.mxu0 0
        %630 = vmatprep.subr.bf16.mxu0 0
        %631 = vmatpush1.bf16.msra.mxu0 0
        %632 = vmatprep.subr.bf16.mxu0 0
        %633 = vmatpush1.bf16.msra.mxu0 0
        %634 = vmatprep.subr.bf16.mxu0 0
        %635 = vmatpush1.bf16.msra.mxu0 0
        %636 = vmatprep.subr.bf16.mxu0 0
        %637 = vmatpush1.bf16.msra.mxu0 0
        %638 = vmatprep.mubr.bf16.mxu0 0
        %639 = vmatmul.mubr.bf16.gmra.mrb[0].mxu0 %v598
        %v640 = vpop.f32.mrb[0].mxu0
        %v641 = vadd.f32 %v582, %v640
        %v642 = vpop.f32.mrb[0].mxu0
        %v643 = vadd.f32 %v584, %v642
        %v644 = vpop.f32.mrb[0].mxu0
        %v645 = vpop.f32.mrb[0].mxu0
        %646 = vdwg.mxu0
        %v647 = vld [vmem:[#allocation2 + $0x2] sm:$0x3f]
        %s648 = scalar_lea.vmem %s1, 12
        %v649 = vld [vmem:[%s648] sm:$0x3]
        %v651 = vcombine.high %v647, %v647
        %v653 = vunpack.c.l.s4 1983009808
        %v654 = vunpack.c.0.s8 %v653
        %v655 = vlaneseq
        %v656 = vshrl.u32 %v655, 7
        %v657 = vsub.s32 %v654, %v656
        %v658 = vrot.slane %v647, %v657
        %v660 = vunpack.c.l.s4 1983009808
        %v661 = vunpack.c.0.s8 %v660
        %v662 = vlaneseq
        %v663 = vshrl.u32 %v662, 7
        %v664 = vsub.s32 %v661, %v663
        %v665 = vrot.slane %v651, %v664
        %v666 = vcombine.high %v658, %v658
        %667 = vrot.lane.b32.xlu0 %v658, 113
        %v668 = vpop.permute.xlu0 %667
        %669 = vrot.lane.b32.xlu0 %v666, 113
        %v670 = vpop.permute.xlu0 %669
        %671 = vrot.lane.b32.xlu0 %v665, 113
        %v672 = vpop.permute.xlu0 %671
        %vm673 = vcmask 924672
        %v674 = vsel %vm673, %v668, %v670
        %v675 = vsel %vm673, %v670, %v672
        %v677 = vsel %vm299, %v649, 0
        %v680 = vsel %vm303, %v674, 0
        %v683 = vsel %vm303, %v675, 0
        %685 = vmatprep.subr.bf16.mxu0 %v683
        %686 = vmatpush1.bf16.msra.mxu0 %v680
        %687 = vmatprep.subr.bf16.mxu0 0
        %688 = vmatpush1.bf16.msra.mxu0 0
        %689 = vmatprep.subr.bf16.mxu0 0
        %690 = vmatpush1.bf16.msra.mxu0 0
        %691 = vmatprep.subr.bf16.mxu0 0
        %692 = vmatpush1.bf16.msra.mxu0 0
        %693 = vmatprep.subr.bf16.mxu0 0
        %694 = vmatpush1.bf16.msra.mxu0 0
        %695 = vmatprep.subr.bf16.mxu0 0
        %696 = vmatpush1.bf16.msra.mxu0 0
        %697 = vmatprep.subr.bf16.mxu0 0
        %698 = vmatpush1.bf16.msra.mxu0 0
        %699 = vmatprep.subr.bf16.mxu0 0
        %700 = vmatpush1.bf16.msra.mxu0 0
        %701 = vmatprep.subr.bf16.mxu0 0
        %702 = vmatpush1.bf16.msra.mxu0 0
        %703 = vmatprep.subr.bf16.mxu0 0
        %704 = vmatpush1.bf16.msra.mxu0 0
        %705 = vmatprep.subr.bf16.mxu0 0
        %706 = vmatpush1.bf16.msra.mxu0 0
        %707 = vmatprep.subr.bf16.mxu0 0
        %708 = vmatpush1.bf16.msra.mxu0 0
        %709 = vmatprep.subr.bf16.mxu0 0
        %710 = vmatpush1.bf16.msra.mxu0 0
        %711 = vmatprep.subr.bf16.mxu0 0
        %712 = vmatpush1.bf16.msra.mxu0 0
        %713 = vmatprep.subr.bf16.mxu0 0
        %714 = vmatpush1.bf16.msra.mxu0 0
        %715 = vmatprep.subr.bf16.mxu0 0
        %716 = vmatpush1.bf16.msra.mxu0 0
        %717 = vmatprep.mubr.bf16.mxu0 0
        %718 = vmatmul.mubr.bf16.gmra.mrb[0].mxu0 %v677
        %v719 = vpop.f32.mrb[0].mxu0
        %v720 = vadd.f32 0.0, %v719
        %v721 = vpop.f32.mrb[0].mxu0
        %v722 = vadd.f32 0.0, %v721
        %v723 = vpop.f32.mrb[0].mxu0
        %v724 = vpop.f32.mrb[0].mxu0
        %725 = vdwg.mxu0
        %v726 = vadd.f32 %v641, %v720
        %v727 = vadd.f32 %v643, %v722
        %v728 = vld [vmem:[#allocation2] sm:$0x3f]
        %s729 = scalar_lea.vmem %s1, 4
        %v730 = vld [vmem:[%s729] sm:$0x3]
        %v731 = vld [vmem:[#allocation2 + $0x2] sm:$0x3f]
        %s732 = scalar_lea.vmem %s1, 10
        %v733 = vld [vmem:[%s732] sm:$0x3]
        %v735 = vcombine.high %v731, %v731
        %v737 = vunpack.c.l.s4 1983009808
        %v738 = vunpack.c.0.s8 %v737
        %v739 = vlaneseq
        %v740 = vshrl.u32 %v739, 7
        %v741 = vsub.s32 %v738, %v740
        %v742 = vrot.slane %v731, %v741
        %v744 = vunpack.c.l.s4 1983009808
        %v745 = vunpack.c.0.s8 %v744
        %v746 = vlaneseq
        %v747 = vshrl.u32 %v746, 7
        %v748 = vsub.s32 %v745, %v747
        %v749 = vrot.slane %v735, %v748
        %v750 = vcombine.high %v742, %v742
        %751 = vrot.lane.b32.xlu0 %v742, 127
        %v752 = vpop.permute.xlu0 %751
        %753 = vrot.lane.b32.xlu0 %v750, 127
        %v754 = vpop.permute.xlu0 %753
        %755 = vrot.lane.b32.xlu0 %v749, 127
        %v756 = vpop.permute.xlu0 %755
        %vm757 = vcmask 1039360
        %v758 = vsel %vm757, %v752, %v754
        %v759 = vsel %vm757, %v754, %v756
        %v761 = vsel %vm299, %v733, 0
        %v764 = vsel %vm303, %v758, 0
        %v767 = vsel %vm303, %v759, 0
        %769 = vmatprep.subr.bf16.mxu0 %v767
        %770 = vmatpush1.bf16.msra.mxu0 %v764
        %771 = vmatprep.subr.bf16.mxu0 0
        %772 = vmatpush1.bf16.msra.mxu0 0
        %773 = vmatprep.subr.bf16.mxu0 0
        %774 = vmatpush1.bf16.msra.mxu0 0
        %775 = vmatprep.subr.bf16.mxu0 0
        %776 = vmatpush1.bf16.msra.mxu0 0
        %777 = vmatprep.subr.bf16.mxu0 0
        %778 = vmatpush1.bf16.msra.mxu0 0
        %779 = vmatprep.subr.bf16.mxu0 0
        %780 = vmatpush1.bf16.msra.mxu0 0
        %781 = vmatprep.subr.bf16.mxu0 0
        %782 = vmatpush1.bf16.msra.mxu0 0
        %783 = vmatprep.subr.bf16.mxu0 0
        %784 = vmatpush1.bf16.msra.mxu0 0
        %785 = vmatprep.subr.bf16.mxu0 0
        %786 = vmatpush1.bf16.msra.mxu0 0
        %787 = vmatprep.subr.bf16.mxu0 0
        %788 = vmatpush1.bf16.msra.mxu0 0
        %789 = vmatprep.subr.bf16.mxu0 0
        %790 = vmatpush1.bf16.msra.mxu0 0
        %791 = vmatprep.subr.bf16.mxu0 0
        %792 = vmatpush1.bf16.msra.mxu0 0
        %793 = vmatprep.subr.bf16.mxu0 0
        %794 = vmatpush1.bf16.msra.mxu0 0
        %795 = vmatprep.subr.bf16.mxu0 0
        %796 = vmatpush1.bf16.msra.mxu0 0
        %797 = vmatprep.subr.bf16.mxu0 0
        %798 = vmatpush1.bf16.msra.mxu0 0
        %799 = vmatprep.subr.bf16.mxu0 0
        %800 = vmatpush1.bf16.msra.mxu0 0
        %801 = vmatprep.mubr.bf16.mxu0 0
        %802 = vmatmul.mubr.bf16.gmra.mrb[0].mxu0 %v761
        %v803 = vpop.f32.mrb[0].mxu0
        %v804 = vadd.f32 0.0, %v803
        %v805 = vpop.f32.mrb[0].mxu0
        %v806 = vadd.f32 0.0, %v805
        %v807 = vpop.f32.mrb[0].mxu0
        %v808 = vpop.f32.mrb[0].mxu0
        %809 = vdwg.mxu0
        %v811 = vcombine.high %v728, %v728
        %v813 = vunpack.c.l.s4 1983009808
        %v814 = vunpack.c.0.s8 %v813
        %v815 = vlaneseq
        %v816 = vshrl.u32 %v815, 7
        %v817 = vsub.s32 %v814, %v816
        %v818 = vrot.slane %v728, %v817
        %v820 = vunpack.c.l.s4 1983009808
        %v821 = vunpack.c.0.s8 %v820
        %v822 = vlaneseq
        %v823 = vshrl.u32 %v822, 7
        %v824 = vsub.s32 %v821, %v823
        %v825 = vrot.slane %v811, %v824
        %v826 = vcombine.high %v818, %v818
        %827 = vrot.lane.b32.xlu0 %v818, 15
        %v828 = vpop.permute.xlu0 %827
        %829 = vrot.lane.b32.xlu0 %v826, 15
        %v830 = vpop.permute.xlu0 %829
        %831 = vrot.lane.b32.xlu0 %v825, 15
        %v832 = vpop.permute.xlu0 %831
        %vm833 = vcmask 121856
        %v834 = vsel %vm833, %v828, %v830
        %v835 = vsel %vm833, %v830, %v832
        %v837 = vsel %vm299, %v730, 0
        %v840 = vsel %vm303, %v834, 0
        %v843 = vsel %vm303, %v835, 0
        %845 = vmatprep.subr.bf16.mxu0 %v843
        %846 = vmatpush1.bf16.msra.mxu0 %v840
        %847 = vmatprep.subr.bf16.mxu0 0
        %848 = vmatpush1.bf16.msra.mxu0 0
        %849 = vmatprep.subr.bf16.mxu0 0
        %850 = vmatpush1.bf16.msra.mxu0 0
        %851 = vmatprep.subr.bf16.mxu0 0
        %852 = vmatpush1.bf16.msra.mxu0 0
        %853 = vmatprep.subr.bf16.mxu0 0
        %854 = vmatpush1.bf16.msra.mxu0 0
        %855 = vmatprep.subr.bf16.mxu0 0
        %856 = vmatpush1.bf16.msra.mxu0 0
        %857 = vmatprep.subr.bf16.mxu0 0
        %858 = vmatpush1.bf16.msra.mxu0 0
        %859 = vmatprep.subr.bf16.mxu0 0
        %860 = vmatpush1.bf16.msra.mxu0 0
        %861 = vmatprep.subr.bf16.mxu0 0
        %862 = vmatpush1.bf16.msra.mxu0 0
        %863 = vmatprep.subr.bf16.mxu0 0
        %864 = vmatpush1.bf16.msra.mxu0 0
        %865 = vmatprep.subr.bf16.mxu0 0
        %866 = vmatpush1.bf16.msra.mxu0 0
        %867 = vmatprep.subr.bf16.mxu0 0
        %868 = vmatpush1.bf16.msra.mxu0 0
        %869 = vmatprep.subr.bf16.mxu0 0
        %870 = vmatpush1.bf16.msra.mxu0 0
        %871 = vmatprep.subr.bf16.mxu0 0
        %872 = vmatpush1.bf16.msra.mxu0 0
        %873 = vmatprep.subr.bf16.mxu0 0
        %874 = vmatpush1.bf16.msra.mxu0 0
        %875 = vmatprep.subr.bf16.mxu0 0
        %876 = vmatpush1.bf16.msra.mxu0 0
        %877 = vmatprep.mubr.bf16.mxu0 0
        %878 = vmatmul.mubr.bf16.gmra.mrb[0].mxu0 %v837
        %v879 = vpop.f32.mrb[0].mxu0
        %v880 = vadd.f32 %v804, %v879
        %v881 = vpop.f32.mrb[0].mxu0
        %v882 = vadd.f32 %v806, %v881
        %v883 = vpop.f32.mrb[0].mxu0
        %v884 = vpop.f32.mrb[0].mxu0
        %885 = vdwg.mxu0
        %v886 = vld [vmem:[#allocation2 + $0x2] sm:$0x3f]
        %s887 = scalar_lea.vmem %s1, 16
        %v888 = vld [vmem:[%s887] sm:$0x3]
        %v890 = vcombine.high %v886, %v886
        %v892 = vunpack.c.l.s4 1983009808
        %v893 = vunpack.c.0.s8 %v892
        %v894 = vlaneseq
        %v895 = vshrl.u32 %v894, 7
        %v896 = vsub.s32 %v893, %v895
        %v897 = vrot.slane %v886, %v896
        %v899 = vunpack.c.l.s4 1983009808
        %v900 = vunpack.c.0.s8 %v899
        %v901 = vlaneseq
        %v902 = vshrl.u32 %v901, 7
        %v903 = vsub.s32 %v900, %v902
        %v904 = vrot.slane %v890, %v903
        %v905 = vcombine.high %v897, %v897
        %906 = vrot.lane.b32.xlu0 %v897, 111
        %v907 = vpop.permute.xlu0 %906
        %908 = vrot.lane.b32.xlu0 %v905, 111
        %v909 = vpop.permute.xlu0 %908
        %910 = vrot.lane.b32.xlu0 %v904, 111
        %v911 = vpop.permute.xlu0 %910
        %vm912 = vcmask 908288
        %v913 = vsel %vm912, %v907, %v909
        %v914 = vsel %vm912, %v909, %v911
        %v916 = vsel %vm299, %v888, 0
        %v919 = vsel %vm303, %v913, 0
        %v922 = vsel %vm303, %v914, 0
        %924 = vmatprep.subr.bf16.mxu0 %v922
        %925 = vmatpush1.bf16.msra.mxu0 %v919
        %926 = vmatprep.subr.bf16.mxu0 0
        %927 = vmatpush1.bf16.msra.mxu0 0
        %928 = vmatprep.subr.bf16.mxu0 0
        %929 = vmatpush1.bf16.msra.mxu0 0
        %930 = vmatprep.subr.bf16.mxu0 0
        %931 = vmatpush1.bf16.msra.mxu0 0
        %932 = vmatprep.subr.bf16.mxu0 0
        %933 = vmatpush1.bf16.msra.mxu0 0
        %934 = vmatprep.subr.bf16.mxu0 0
        %935 = vmatpush1.bf16.msra.mxu0 0
        %936 = vmatprep.subr.bf16.mxu0 0
        %937 = vmatpush1.bf16.msra.mxu0 0
        %938 = vmatprep.subr.bf16.mxu0 0
        %939 = vmatpush1.bf16.msra.mxu0 0
        %940 = vmatprep.subr.bf16.mxu0 0
        %941 = vmatpush1.bf16.msra.mxu0 0
        %942 = vmatprep.subr.bf16.mxu0 0
        %943 = vmatpush1.bf16.msra.mxu0 0
        %944 = vmatprep.subr.bf16.mxu0 0
        %945 = vmatpush1.bf16.msra.mxu0 0
        %946 = vmatprep.subr.bf16.mxu0 0
        %947 = vmatpush1.bf16.msra.mxu0 0
        %948 = vmatprep.subr.bf16.mxu0 0
        %949 = vmatpush1.bf16.msra.mxu0 0
        %950 = vmatprep.subr.bf16.mxu0 0
        %951 = vmatpush1.bf16.msra.mxu0 0
        %952 = vmatprep.subr.bf16.mxu0 0
        %953 = vmatpush1.bf16.msra.mxu0 0
        %954 = vmatprep.subr.bf16.mxu0 0
        %955 = vmatpush1.bf16.msra.mxu0 0
        %956 = vmatprep.mubr.bf16.mxu0 0
        %957 = vmatmul.mubr.bf16.gmra.mrb[0].mxu0 %v916
        %v958 = vpop.f32.mrb[0].mxu0
        %v959 = vadd.f32 0.0, %v958
        %v960 = vpop.f32.mrb[0].mxu0
        %v961 = vadd.f32 0.0, %v960
        %v962 = vpop.f32.mrb[0].mxu0
        %v963 = vpop.f32.mrb[0].mxu0
        %964 = vdwg.mxu0
        %v965 = vadd.f32 %v880, %v959
        %v966 = vadd.f32 %v882, %v961
        %v967 = vld [vmem:[%s5] sm:$0x3]
        %v969 = vlaneseq
        %v970 = vshrl.u32 %v969, 7
        %v971 = vsub.s32 0, %v970
        %v972 = vrot.slane %v967, %v971
        %v973 = vlaneseq
        %v974 = vshrl.u32 %v973, 7
        %v975 = vsub.s32 1, %v974
        %v976 = vrot.slane %v967, %v975
        %v979 = vmul.f32 %v972, %v726
        %v980 = vmul.f32 %v976, %v727
        %v981 = vadd.f32 %v506, %v979
        %v982 = vadd.f32 %v507, %v980
        %v983 = vld [vmem:[%s6] sm:$0x3]
        %v985 = vlaneseq
        %v986 = vshrl.u32 %v985, 7
        %v987 = vsub.s32 0, %v986
        %v988 = vrot.slane %v983, %v987
        %v989 = vlaneseq
        %v990 = vshrl.u32 %v989, 7
        %v991 = vsub.s32 1, %v990
        %v992 = vrot.slane %v983, %v991
        %v995 = vmul.f32 %v988, %v965
        %v996 = vmul.f32 %v992, %v966
        %v997 = vadd.f32 %v981, %v995
        %v998 = vadd.f32 %v982, %v996
        %v999 = vld [vmem:[%s2] sm:$0xf]
        %1001 = vset.pattern.permute.xlu0 0
        %1002 = vperm.xlu0 %1001, %v999
        %v1003 = vpop.permute.xlu0 %1002
        %v1005 = vadd.f32 %v997, %v1003
        %v1006 = vadd.f32 %v998, %v1003
        %v1007 = vmul.f32 %v1005, 0.5
        %v1008 = vmul.f32 %v1006, 0.5
        %v1009 = vmul.f32 %v1005, %v1005
        %v1010 = vmul.f32 %v1006, %v1006
        %v1011 = vmul.f32 %v1009, %v1005
        %v1012 = vmul.f32 %v1010, %v1006
        %v1013 = vmul.f32 %v1011, 0.044715
        %v1014 = vmul.f32 %v1012, 0.044715
        %v1015 = vadd.f32 %v1005, %v1013
        %v1016 = vadd.f32 %v1006, %v1014
        %v1017 = vmul.f32 %v1015, 0.7978846
        %v1018 = vmul.f32 %v1016, 0.7978846
        %v1019 = vtanh.pop %v1017
        %v1020 = vtanh.pop %v1018
        %v1021 = vadd.f32 %v1019, 1.0
        %v1022 = vadd.f32 %v1020, 1.0
        %v1023 = vmul.f32 %v1007, %v1021
        %v1024 = vmul.f32 %v1008, %v1022
        %v1025 = vpack.c.bf16 %v1023, %v1023
        %v1026 = vpack.c.bf16 %v1024, %v1024
        %v1029 = vcombine.low %v1025, %v1026
        %v1031 = vunpack.c.l.s4 1983009808
        %v1032 = vunpack.c.0.s8 %v1031
        %v1033 = vlaneseq
        %v1034 = vshrl.u32 %v1033, 7
        %v1035 = vsub.s32 %v1032, %v1034
        %v1036 = vrot.slane %v1029, %v1035
        %1038 = vst [vmem:[#allocation3 + $0x2] sm:$0xf] %v1036
        %v1039 = vld [vmem:[#allocation3] sm:$0x3f]
        %s1040 = scalar_lea.vmem %s3, 2
        %v1041 = vld [vmem:[%s1040] sm:$0x3]
        %v1042 = vld [vmem:[#allocation3 + $0x2] sm:$0xf]
        %s1043 = scalar_lea.vmem %s3, 8
        %v1044 = vld [vmem:[%s1043] sm:$0x3]
        %v1047 = vunpack.c.l.s4 1983009808
        %v1048 = vunpack.c.0.s8 %v1047
        %v1049 = vlaneseq
        %v1050 = vshrl.u32 %v1049, 7
        %v1051 = vsub.s32 %v1048, %v1050
        %v1052 = vrot.slane %v1042, %v1051
        %v1053 = vcombine.high %v1052, %v1052
        %v1055 = vsel %vm299, %v1044, 0
        %v1058 = vsel %vm303, %v1052, 0
        %v1061 = vsel %vm303, %v1053, 0
        %1063 = vmatprep.subr.bf16.mxu0 %v1061
        %1064 = vmatpush1.bf16.msra.mxu0 %v1058
        %1065 = vmatprep.subr.bf16.mxu0 0
        %1066 = vmatpush1.bf16.msra.mxu0 0
        %1067 = vmatprep.subr.bf16.mxu0 0
        %1068 = vmatpush1.bf16.msra.mxu0 0
        %1069 = vmatprep.subr.bf16.mxu0 0
        %1070 = vmatpush1.bf16.msra.mxu0 0
        %1071 = vmatprep.subr.bf16.mxu0 0
        %1072 = vmatpush1.bf16.msra.mxu0 0
        %1073 = vmatprep.subr.bf16.mxu0 0
        %1074 = vmatpush1.bf16.msra.mxu0 0
        %1075 = vmatprep.subr.bf16.mxu0 0
        %1076 = vmatpush1.bf16.msra.mxu0 0
        %1077 = vmatprep.subr.bf16.mxu0 0
        %1078 = vmatpush1.bf16.msra.mxu0 0
        %1079 = vmatprep.subr.bf16.mxu0 0
        %1080 = vmatpush1.bf16.msra.mxu0 0
        %1081 = vmatprep.subr.bf16.mxu0 0
        %1082 = vmatpush1.bf16.msra.mxu0 0
        %1083 = vmatprep.subr.bf16.mxu0 0
        %1084 = vmatpush1.bf16.msra.mxu0 0
        %1085 = vmatprep.subr.bf16.mxu0 0
        %1086 = vmatpush1.bf16.msra.mxu0 0
        %1087 = vmatprep.subr.bf16.mxu0 0
        %1088 = vmatpush1.bf16.msra.mxu0 0
        %1089 = vmatprep.subr.bf16.mxu0 0
        %1090 = vmatpush1.bf16.msra.mxu0 0
        %1091 = vmatprep.subr.bf16.mxu0 0
        %1092 = vmatpush1.bf16.msra.mxu0 0
        %1093 = vmatprep.subr.bf16.mxu0 0
        %1094 = vmatpush1.bf16.msra.mxu0 0
        %1095 = vmatprep.mubr.bf16.mxu0 0
        %1096 = vmatmul.mubr.bf16.gmra.mrb[0].mxu0 %v1055
        %v1097 = vpop.f32.mrb[0].mxu0
        %v1098 = vadd.f32 0.0, %v1097
        %v1099 = vpop.f32.mrb[0].mxu0
        %v1100 = vadd.f32 0.0, %v1099
        %v1101 = vpop.f32.mrb[0].mxu0
        %v1102 = vpop.f32.mrb[0].mxu0
        %1103 = vdwg.mxu0
        %v1105 = vcombine.high %v1039, %v1039
        %v1107 = vunpack.c.l.s4 1983009808
        %v1108 = vunpack.c.0.s8 %v1107
        %v1109 = vlaneseq
        %v1110 = vshrl.u32 %v1109, 7
        %v1111 = vsub.s32 %v1108, %v1110
        %v1112 = vrot.slane %v1039, %v1111
        %v1114 = vunpack.c.l.s4 1983009808
        %v1115 = vunpack.c.0.s8 %v1114
        %v1116 = vlaneseq
        %v1117 = vshrl.u32 %v1116, 7
        %v1118 = vsub.s32 %v1115, %v1117
        %v1119 = vrot.slane %v1105, %v1118
        %v1120 = vcombine.high %v1112, %v1112
        %1121 = vrot.lane.b32.xlu0 %v1112, 16
        %v1122 = vpop.permute.xlu0 %1121
        %1123 = vrot.lane.b32.xlu0 %v1120, 16
        %v1124 = vpop.permute.xlu0 %1123
        %1125 = vrot.lane.b32.xlu0 %v1119, 16
        %v1126 = vpop.permute.xlu0 %1125
        %v1127 = vsel %vm374, %v1122, %v1124
        %v1128 = vsel %vm374, %v1124, %v1126
        %v1130 = vsel %vm299, %v1041, 0
        %v1133 = vsel %vm303, %v1127, 0
        %v1136 = vsel %vm303, %v1128, 0
        %1138 = vmatprep.subr.bf16.mxu0 %v1136
        %1139 = vmatpush1.bf16.msra.mxu0 %v1133
        %1140 = vmatprep.subr.bf16.mxu0 0
        %1141 = vmatpush1.bf16.msra.mxu0 0
        %1142 = vmatprep.subr.bf16.mxu0 0
        %1143 = vmatpush1.bf16.msra.mxu0 0
        %1144 = vmatprep.subr.bf16.mxu0 0
        %1145 = vmatpush1.bf16.msra.mxu0 0
        %1146 = vmatprep.subr.bf16.mxu0 0
        %1147 = vmatpush1.bf16.msra.mxu0 0
        %1148 = vmatprep.subr.bf16.mxu0 0
        %1149 = vmatpush1.bf16.msra.mxu0 0
        %1150 = vmatprep.subr.bf16.mxu0 0
        %1151 = vmatpush1.bf16.msra.mxu0 0
        %1152 = vmatprep.subr.bf16.mxu0 0
        %1153 = vmatpush1.bf16.msra.mxu0 0
        %1154 = vmatprep.subr.bf16.mxu0 0
        %1155 = vmatpush1.bf16.msra.mxu0 0
        %1156 = vmatprep.subr.bf16.mxu0 0
        %1157 = vmatpush1.bf16.msra.mxu0 0
        %1158 = vmatprep.subr.bf16.mxu0 0
        %1159 = vmatpush1.bf16.msra.mxu0 0
        %1160 = vmatprep.subr.bf16.mxu0 0
        %1161 = vmatpush1.bf16.msra.mxu0 0
        %1162 = vmatprep.subr.bf16.mxu0 0
        %1163 = vmatpush1.bf16.msra.mxu0 0
        %1164 = vmatprep.subr.bf16.mxu0 0
        %1165 = vmatpush1.bf16.msra.mxu0 0
        %1166 = vmatprep.subr.bf16.mxu0 0
        %1167 = vmatpush1.bf16.msra.mxu0 0
        %1168 = vmatprep.subr.bf16.mxu0 0
        %1169 = vmatpush1.bf16.msra.mxu0 0
        %1170 = vmatprep.mubr.bf16.mxu0 0
        %1171 = vmatmul.mubr.bf16.gmra.mrb[0].mxu0 %v1130
        %v1172 = vpop.f32.mrb[0].mxu0
        %v1173 = vadd.f32 %v1098, %v1172
        %v1174 = vpop.f32.mrb[0].mxu0
        %v1175 = vadd.f32 %v1100, %v1174
        %v1176 = vpop.f32.mrb[0].mxu0
        %v1177 = vpop.f32.mrb[0].mxu0
        %1178 = vdwg.mxu0
        %v1179 = vld [vmem:[#allocation3 + $0x2] sm:$0x3f]
        %s1180 = scalar_lea.vmem %s3, 14
        %v1181 = vld [vmem:[%s1180] sm:$0x3]
        %v1183 = vcombine.high %v1179, %v1179
        %v1185 = vunpack.c.l.s4 1983009808
        %v1186 = vunpack.c.0.s8 %v1185
        %v1187 = vlaneseq
        %v1188 = vshrl.u32 %v1187, 7
        %v1189 = vsub.s32 %v1186, %v1188
        %v1190 = vrot.slane %v1179, %v1189
        %v1192 = vunpack.c.l.s4 1983009808
        %v1193 = vunpack.c.0.s8 %v1192
        %v1194 = vlaneseq
        %v1195 = vshrl.u32 %v1194, 7
        %v1196 = vsub.s32 %v1193, %v1195
        %v1197 = vrot.slane %v1183, %v1196
        %v1198 = vcombine.high %v1190, %v1190
        %1199 = vrot.lane.b32.xlu0 %v1190, 112
        %v1200 = vpop.permute.xlu0 %1199
        %1201 = vrot.lane.b32.xlu0 %v1198, 112
        %v1202 = vpop.permute.xlu0 %1201
        %1203 = vrot.lane.b32.xlu0 %v1197, 112
        %v1204 = vpop.permute.xlu0 %1203
        %v1205 = vsel %vm453, %v1200, %v1202
        %v1206 = vsel %vm453, %v1202, %v1204
        %v1208 = vsel %vm299, %v1181, 0
        %v1211 = vsel %vm303, %v1205, 0
        %v1214 = vsel %vm303, %v1206, 0
        %1216 = vmatprep.subr.bf16.mxu0 %v1214
        %1217 = vmatpush1.bf16.msra.mxu0 %v1211
        %1218 = vmatprep.subr.bf16.mxu0 0
        %1219 = vmatpush1.bf16.msra.mxu0 0
        %1220 = vmatprep.subr.bf16.mxu0 0
        %1221 = vmatpush1.bf16.msra.mxu0 0
        %1222 = vmatprep.subr.bf16.mxu0 0
        %1223 = vmatpush1.bf16.msra.mxu0 0
        %1224 = vmatprep.subr.bf16.mxu0 0
        %1225 = vmatpush1.bf16.msra.mxu0 0
        %1226 = vmatprep.subr.bf16.mxu0 0
        %1227 = vmatpush1.bf16.msra.mxu0 0
        %1228 = vmatprep.subr.bf16.mxu0 0
        %1229 = vmatpush1.bf16.msra.mxu0 0
        %1230 = vmatprep.subr.bf16.mxu0 0
        %1231 = vmatpush1.bf16.msra.mxu0 0
        %1232 = vmatprep.subr.bf16.mxu0 0
        %1233 = vmatpush1.bf16.msra.mxu0 0
        %1234 = vmatprep.subr.bf16.mxu0 0
        %1235 = vmatpush1.bf16.msra.mxu0 0
        %1236 = vmatprep.subr.bf16.mxu0 0
        %1237 = vmatpush1.bf16.msra.mxu0 0
        %1238 = vmatprep.subr.bf16.mxu0 0
        %1239 = vmatpush1.bf16.msra.mxu0 0
        %1240 = vmatprep.subr.bf16.mxu0 0
        %1241 = vmatpush1.bf16.msra.mxu0 0
        %1242 = vmatprep.subr.bf16.mxu0 0
        %1243 = vmatpush1.bf16.msra.mxu0 0
        %1244 = vmatprep.subr.bf16.mxu0 0
        %1245 = vmatpush1.bf16.msra.mxu0 0
        %1246 = vmatprep.subr.bf16.mxu0 0
        %1247 = vmatpush1.bf16.msra.mxu0 0
        %1248 = vmatprep.mubr.bf16.mxu0 0
        %1249 = vmatmul.mubr.bf16.gmra.mrb[0].mxu0 %v1208
        %v1250 = vpop.f32.mrb[0].mxu0
        %v1251 = vadd.f32 0.0, %v1250
        %v1252 = vpop.f32.mrb[0].mxu0
        %v1253 = vadd.f32 0.0, %v1252
        %v1254 = vpop.f32.mrb[0].mxu0
        %v1255 = vpop.f32.mrb[0].mxu0
        %1256 = vdwg.mxu0
        %v1257 = vadd.f32 %v1173, %v1251
        %v1258 = vadd.f32 %v1175, %v1253
        %v1259 = vld [vmem:[#allocation3] sm:$0x3f]
        %v1260 = vld [vmem:[%s3] sm:$0x3]
        %s1261 = scalar_lea.vmem %s3, 6
        %v1262 = vld [vmem:[%s1261] sm:$0x3]
        %v1264 = vcombine.high %v1259, %v1259
        %v1266 = vunpack.c.l.s4 1983009808
        %v1267 = vunpack.c.0.s8 %v1266
        %v1268 = vlaneseq
        %v1269 = vshrl.u32 %v1268, 7
        %v1270 = vsub.s32 %v1267, %v1269
        %v1271 = vrot.slane %v1259, %v1270
        %v1273 = vunpack.c.l.s4 1983009808
        %v1274 = vunpack.c.0.s8 %v1273
        %v1275 = vlaneseq
        %v1276 = vshrl.u32 %v1275, 7
        %v1277 = vsub.s32 %v1274, %v1276
        %v1278 = vrot.slane %v1264, %v1277
        %v1279 = vcombine.high %v1271, %v1271
        %1280 = vrot.lane.b32.xlu0 %v1271, 1
        %v1281 = vpop.permute.xlu0 %1280
        %1282 = vrot.lane.b32.xlu0 %v1279, 1
        %v1283 = vpop.permute.xlu0 %1282
        %1284 = vrot.lane.b32.xlu0 %v1278, 1
        %v1285 = vpop.permute.xlu0 %1284
        %v1286 = vsel %vm535, %v1281, %v1283
        %v1287 = vsel %vm535, %v1283, %v1285
        %v1289 = vsel %vm299, %v1262, 0
        %v1292 = vsel %vm303, %v1286, 0
        %v1295 = vsel %vm303, %v1287, 0
        %1297 = vmatprep.subr.bf16.mxu0 %v1295
        %1298 = vmatpush1.bf16.msra.mxu0 %v1292
        %1299 = vmatprep.subr.bf16.mxu0 0
        %1300 = vmatpush1.bf16.msra.mxu0 0
        %1301 = vmatprep.subr.bf16.mxu0 0
        %1302 = vmatpush1.bf16.msra.mxu0 0
        %1303 = vmatprep.subr.bf16.mxu0 0
        %1304 = vmatpush1.bf16.msra.mxu0 0
        %1305 = vmatprep.subr.bf16.mxu0 0
        %1306 = vmatpush1.bf16.msra.mxu0 0
        %1307 = vmatprep.subr.bf16.mxu0 0
        %1308 = vmatpush1.bf16.msra.mxu0 0
        %1309 = vmatprep.subr.bf16.mxu0 0
        %1310 = vmatpush1.bf16.msra.mxu0 0
        %1311 = vmatprep.subr.bf16.mxu0 0
        %1312 = vmatpush1.bf16.msra.mxu0 0
        %1313 = vmatprep.subr.bf16.mxu0 0
        %1314 = vmatpush1.bf16.msra.mxu0 0
        %1315 = vmatprep.subr.bf16.mxu0 0
        %1316 = vmatpush1.bf16.msra.mxu0 0
        %1317 = vmatprep.subr.bf16.mxu0 0
        %1318 = vmatpush1.bf16.msra.mxu0 0
        %1319 = vmatprep.subr.bf16.mxu0 0
        %1320 = vmatpush1.bf16.msra.mxu0 0
        %1321 = vmatprep.subr.bf16.mxu0 0
        %1322 = vmatpush1.bf16.msra.mxu0 0
        %1323 = vmatprep.subr.bf16.mxu0 0
        %1324 = vmatpush1.bf16.msra.mxu0 0
        %1325 = vmatprep.subr.bf16.mxu0 0
        %1326 = vmatpush1.bf16.msra.mxu0 0
        %1327 = vmatprep.subr.bf16.mxu0 0
        %1328 = vmatpush1.bf16.msra.mxu0 0
        %1329 = vmatprep.mubr.bf16.mxu0 0
        %1330 = vmatmul.mubr.bf16.gmra.mrb[0].mxu0 %v1289
        %v1331 = vpop.f32.mrb[0].mxu0
        %v1332 = vadd.f32 0.0, %v1331
        %v1333 = vpop.f32.mrb[0].mxu0
        %v1334 = vadd.f32 0.0, %v1333
        %v1335 = vpop.f32.mrb[0].mxu0
        %v1336 = vpop.f32.mrb[0].mxu0
        %1337 = vdwg.mxu0
        %1338 = vrot.lane.b32.xlu0 %v1271, 17
        %v1339 = vpop.permute.xlu0 %1338
        %1340 = vrot.lane.b32.xlu0 %v1279, 17
        %v1341 = vpop.permute.xlu0 %1340
        %1342 = vrot.lane.b32.xlu0 %v1278, 17
        %v1343 = vpop.permute.xlu0 %1342
        %v1344 = vsel %vm594, %v1339, %v1341
        %v1345 = vsel %vm594, %v1341, %v1343
        %v1347 = vsel %vm299, %v1260, 0
        %v1350 = vsel %vm303, %v1344, 0
        %v1353 = vsel %vm303, %v1345, 0
        %1355 = vmatprep.subr.bf16.mxu0 %v1353
        %1356 = vmatpush1.bf16.msra.mxu0 %v1350
        %1357 = vmatprep.subr.bf16.mxu0 0
        %1358 = vmatpush1.bf16.msra.mxu0 0
        %1359 = vmatprep.subr.bf16.mxu0 0
        %1360 = vmatpush1.bf16.msra.mxu0 0
        %1361 = vmatprep.subr.bf16.mxu0 0
        %1362 = vmatpush1.bf16.msra.mxu0 0
        %1363 = vmatprep.subr.bf16.mxu0 0
        %1364 = vmatpush1.bf16.msra.mxu0 0
        %1365 = vmatprep.subr.bf16.mxu0 0
        %1366 = vmatpush1.bf16.msra.mxu0 0
        %1367 = vmatprep.subr.bf16.mxu0 0
        %1368 = vmatpush1.bf16.msra.mxu0 0
        %1369 = vmatprep.subr.bf16.mxu0 0
        %1370 = vmatpush1.bf16.msra.mxu0 0
        %1371 = vmatprep.subr.bf16.mxu0 0
        %1372 = vmatpush1.bf16.msra.mxu0 0
        %1373 = vmatprep.subr.bf16.mxu0 0
        %1374 = vmatpush1.bf16.msra.mxu0 0
        %1375 = vmatprep.subr.bf16.mxu0 0
        %1376 = vmatpush1.bf16.msra.mxu0 0
        %1377 = vmatprep.subr.bf16.mxu0 0
        %1378 = vmatpush1.bf16.msra.mxu0 0
        %1379 = vmatprep.subr.bf16.mxu0 0
        %1380 = vmatpush1.bf16.msra.mxu0 0
        %1381 = vmatprep.subr.bf16.mxu0 0
        %1382 = vmatpush1.bf16.msra.mxu0 0
        %1383 = vmatprep.subr.bf16.mxu0 0
        %1384 = vmatpush1.bf16.msra.mxu0 0
        %1385 = vmatprep.subr.bf16.mxu0 0
        %1386 = vmatpush1.bf16.msra.mxu0 0
        %1387 = vmatprep.mubr.bf16.mxu0 0
        %1388 = vmatmul.mubr.bf16.gmra.mrb[0].mxu0 %v1347
        %v1389 = vpop.f32.mrb[0].mxu0
        %v1390 = vadd.f32 %v1332, %v1389
        %v1391 = vpop.f32.mrb[0].mxu0
        %v1392 = vadd.f32 %v1334, %v1391
        %v1393 = vpop.f32.mrb[0].mxu0
        %v1394 = vpop.f32.mrb[0].mxu0
        %1395 = vdwg.mxu0
        %v1396 = vld [vmem:[#allocation3 + $0x2] sm:$0x3f]
        %s1397 = scalar_lea.vmem %s3, 12
        %v1398 = vld [vmem:[%s1397] sm:$0x3]
        %v1400 = vcombine.high %v1396, %v1396
        %v1402 = vunpack.c.l.s4 1983009808
        %v1403 = vunpack.c.0.s8 %v1402
        %v1404 = vlaneseq
        %v1405 = vshrl.u32 %v1404, 7
        %v1406 = vsub.s32 %v1403, %v1405
        %v1407 = vrot.slane %v1396, %v1406
        %v1409 = vunpack.c.l.s4 1983009808
        %v1410 = vunpack.c.0.s8 %v1409
        %v1411 = vlaneseq
        %v1412 = vshrl.u32 %v1411, 7
        %v1413 = vsub.s32 %v1410, %v1412
        %v1414 = vrot.slane %v1400, %v1413
        %v1415 = vcombine.high %v1407, %v1407
        %1416 = vrot.lane.b32.xlu0 %v1407, 113
        %v1417 = vpop.permute.xlu0 %1416
        %1418 = vrot.lane.b32.xlu0 %v1415, 113
        %v1419 = vpop.permute.xlu0 %1418
        %1420 = vrot.lane.b32.xlu0 %v1414, 113
        %v1421 = vpop.permute.xlu0 %1420
        %v1422 = vsel %vm673, %v1417, %v1419
        %v1423 = vsel %vm673, %v1419, %v1421
        %v1425 = vsel %vm299, %v1398, 0
        %v1428 = vsel %vm303, %v1422, 0
        %v1431 = vsel %vm303, %v1423, 0
        %1433 = vmatprep.subr.bf16.mxu0 %v1431
        %1434 = vmatpush1.bf16.msra.mxu0 %v1428
        %1435 = vmatprep.subr.bf16.mxu0 0
        %1436 = vmatpush1.bf16.msra.mxu0 0
        %1437 = vmatprep.subr.bf16.mxu0 0
        %1438 = vmatpush1.bf16.msra.mxu0 0
        %1439 = vmatprep.subr.bf16.mxu0 0
        %1440 = vmatpush1.bf16.msra.mxu0 0
        %1441 = vmatprep.subr.bf16.mxu0 0
        %1442 = vmatpush1.bf16.msra.mxu0 0
        %1443 = vmatprep.subr.bf16.mxu0 0
        %1444 = vmatpush1.bf16.msra.mxu0 0
        %1445 = vmatprep.subr.bf16.mxu0 0
        %1446 = vmatpush1.bf16.msra.mxu0 0
        %1447 = vmatprep.subr.bf16.mxu0 0
        %1448 = vmatpush1.bf16.msra.mxu0 0
        %1449 = vmatprep.subr.bf16.mxu0 0
        %1450 = vmatpush1.bf16.msra.mxu0 0
        %1451 = vmatprep.subr.bf16.mxu0 0
        %1452 = vmatpush1.bf16.msra.mxu0 0
        %1453 = vmatprep.subr.bf16.mxu0 0
        %1454 = vmatpush1.bf16.msra.mxu0 0
        %1455 = vmatprep.subr.bf16.mxu0 0
        %1456 = vmatpush1.bf16.msra.mxu0 0
        %1457 = vmatprep.subr.bf16.mxu0 0
        %1458 = vmatpush1.bf16.msra.mxu0 0
        %1459 = vmatprep.subr.bf16.mxu0 0
        %1460 = vmatpush1.bf16.msra.mxu0 0
        %1461 = vmatprep.subr.bf16.mxu0 0
        %1462 = vmatpush1.bf16.msra.mxu0 0
        %1463 = vmatprep.subr.bf16.mxu0 0
        %1464 = vmatpush1.bf16.msra.mxu0 0
        %1465 = vmatprep.mubr.bf16.mxu0 0
        %1466 = vmatmul.mubr.bf16.gmra.mrb[0].mxu0 %v1425
        %v1467 = vpop.f32.mrb[0].mxu0
        %v1468 = vadd.f32 0.0, %v1467
        %v1469 = vpop.f32.mrb[0].mxu0
        %v1470 = vadd.f32 0.0, %v1469
        %v1471 = vpop.f32.mrb[0].mxu0
        %v1472 = vpop.f32.mrb[0].mxu0
        %1473 = vdwg.mxu0
        %v1474 = vadd.f32 %v1390, %v1468
        %v1475 = vadd.f32 %v1392, %v1470
        %v1476 = vld [vmem:[#allocation3] sm:$0x3f]
        %s1477 = scalar_lea.vmem %s3, 4
        %v1478 = vld [vmem:[%s1477] sm:$0x3]
        %v1479 = vld [vmem:[#allocation3 + $0x2] sm:$0x3f]
        %s1480 = scalar_lea.vmem %s3, 10
        %v1481 = vld [vmem:[%s1480] sm:$0x3]
        %v1483 = vcombine.high %v1479, %v1479
        %v1485 = vunpack.c.l.s4 1983009808
        %v1486 = vunpack.c.0.s8 %v1485
        %v1487 = vlaneseq
        %v1488 = vshrl.u32 %v1487, 7
        %v1489 = vsub.s32 %v1486, %v1488
        %v1490 = vrot.slane %v1479, %v1489
        %v1492 = vunpack.c.l.s4 1983009808
        %v1493 = vunpack.c.0.s8 %v1492
        %v1494 = vlaneseq
        %v1495 = vshrl.u32 %v1494, 7
        %v1496 = vsub.s32 %v1493, %v1495
        %v1497 = vrot.slane %v1483, %v1496
        %v1498 = vcombine.high %v1490, %v1490
        %1499 = vrot.lane.b32.xlu0 %v1490, 127
        %v1500 = vpop.permute.xlu0 %1499
        %1501 = vrot.lane.b32.xlu0 %v1498, 127
        %v1502 = vpop.permute.xlu0 %1501
        %1503 = vrot.lane.b32.xlu0 %v1497, 127
        %v1504 = vpop.permute.xlu0 %1503
        %v1505 = vsel %vm757, %v1500, %v1502
        %v1506 = vsel %vm757, %v1502, %v1504
        %v1508 = vsel %vm299, %v1481, 0
        %v1511 = vsel %vm303, %v1505, 0
        %v1514 = vsel %vm303, %v1506, 0
        %1516 = vmatprep.subr.bf16.mxu0 %v1514
        %1517 = vmatpush1.bf16.msra.mxu0 %v1511
        %1518 = vmatprep.subr.bf16.mxu0 0
        %1519 = vmatpush1.bf16.msra.mxu0 0
        %1520 = vmatprep.subr.bf16.mxu0 0
        %1521 = vmatpush1.bf16.msra.mxu0 0
        %1522 = vmatprep.subr.bf16.mxu0 0
        %1523 = vmatpush1.bf16.msra.mxu0 0
        %1524 = vmatprep.subr.bf16.mxu0 0
        %1525 = vmatpush1.bf16.msra.mxu0 0
        %1526 = vmatprep.subr.bf16.mxu0 0
        %1527 = vmatpush1.bf16.msra.mxu0 0
        %1528 = vmatprep.subr.bf16.mxu0 0
        %1529 = vmatpush1.bf16.msra.mxu0 0
        %1530 = vmatprep.subr.bf16.mxu0 0
        %1531 = vmatpush1.bf16.msra.mxu0 0
        %1532 = vmatprep.subr.bf16.mxu0 0
        %1533 = vmatpush1.bf16.msra.mxu0 0
        %1534 = vmatprep.subr.bf16.mxu0 0
        %1535 = vmatpush1.bf16.msra.mxu0 0
        %1536 = vmatprep.subr.bf16.mxu0 0
        %1537 = vmatpush1.bf16.msra.mxu0 0
        %1538 = vmatprep.subr.bf16.mxu0 0
        %1539 = vmatpush1.bf16.msra.mxu0 0
        %1540 = vmatprep.subr.bf16.mxu0 0
        %1541 = vmatpush1.bf16.msra.mxu0 0
        %1542 = vmatprep.subr.bf16.mxu0 0
        %1543 = vmatpush1.bf16.msra.mxu0 0
        %1544 = vmatprep.subr.bf16.mxu0 0
        %1545 = vmatpush1.bf16.msra.mxu0 0
        %1546 = vmatprep.subr.bf16.mxu0 0
        %1547 = vmatpush1.bf16.msra.mxu0 0
        %1548 = vmatprep.mubr.bf16.mxu0 0
        %1549 = vmatmul.mubr.bf16.gmra.mrb[0].mxu0 %v1508
        %v1550 = vpop.f32.mrb[0].mxu0
        %v1551 = vadd.f32 0.0, %v1550
        %v1552 = vpop.f32.mrb[0].mxu0
        %v1553 = vadd.f32 0.0, %v1552
        %v1554 = vpop.f32.mrb[0].mxu0
        %v1555 = vpop.f32.mrb[0].mxu0
        %1556 = vdwg.mxu0
        %v1558 = vcombine.high %v1476, %v1476
        %v1560 = vunpack.c.l.s4 1983009808
        %v1561 = vunpack.c.0.s8 %v1560
        %v1562 = vlaneseq
        %v1563 = vshrl.u32 %v1562, 7
        %v1564 = vsub.s32 %v1561, %v1563
        %v1565 = vrot.slane %v1476, %v1564
        %v1567 = vunpack.c.l.s4 1983009808
        %v1568 = vunpack.c.0.s8 %v1567
        %v1569 = vlaneseq
        %v1570 = vshrl.u32 %v1569, 7
        %v1571 = vsub.s32 %v1568, %v1570
        %v1572 = vrot.slane %v1558, %v1571
        %v1573 = vcombine.high %v1565, %v1565
        %1574 = vrot.lane.b32.xlu0 %v1565, 15
        %v1575 = vpop.permute.xlu0 %1574
        %1576 = vrot.lane.b32.xlu0 %v1573, 15
        %v1577 = vpop.permute.xlu0 %1576
        %1578 = vrot.lane.b32.xlu0 %v1572, 15
        %v1579 = vpop.permute.xlu0 %1578
        %v1580 = vsel %vm833, %v1575, %v1577
        %v1581 = vsel %vm833, %v1577, %v1579
        %v1583 = vsel %vm299, %v1478, 0
        %v1586 = vsel %vm303, %v1580, 0
        %v1589 = vsel %vm303, %v1581, 0
        %1591 = vmatprep.subr.bf16.mxu0 %v1589
        %1592 = vmatpush1.bf16.msra.mxu0 %v1586
        %1593 = vmatprep.subr.bf16.mxu0 0
        %1594 = vmatpush1.bf16.msra.mxu0 0
        %1595 = vmatprep.subr.bf16.mxu0 0
        %1596 = vmatpush1.bf16.msra.mxu0 0
        %1597 = vmatprep.subr.bf16.mxu0 0
        %1598 = vmatpush1.bf16.msra.mxu0 0
        %1599 = vmatprep.subr.bf16.mxu0 0
        %1600 = vmatpush1.bf16.msra.mxu0 0
        %1601 = vmatprep.subr.bf16.mxu0 0
        %1602 = vmatpush1.bf16.msra.mxu0 0
        %1603 = vmatprep.subr.bf16.mxu0 0
        %1604 = vmatpush1.bf16.msra.mxu0 0
        %1605 = vmatprep.subr.bf16.mxu0 0
        %1606 = vmatpush1.bf16.msra.mxu0 0
        %1607 = vmatprep.subr.bf16.mxu0 0
        %1608 = vmatpush1.bf16.msra.mxu0 0
        %1609 = vmatprep.subr.bf16.mxu0 0
        %1610 = vmatpush1.bf16.msra.mxu0 0
        %1611 = vmatprep.subr.bf16.mxu0 0
        %1612 = vmatpush1.bf16.msra.mxu0 0
        %1613 = vmatprep.subr.bf16.mxu0 0
        %1614 = vmatpush1.bf16.msra.mxu0 0
        %1615 = vmatprep.subr.bf16.mxu0 0
        %1616 = vmatpush1.bf16.msra.mxu0 0
        %1617 = vmatprep.subr.bf16.mxu0 0
        %1618 = vmatpush1.bf16.msra.mxu0 0
        %1619 = vmatprep.subr.bf16.mxu0 0
        %1620 = vmatpush1.bf16.msra.mxu0 0
        %1621 = vmatprep.subr.bf16.mxu0 0
        %1622 = vmatpush1.bf16.msra.mxu0 0
        %1623 = vmatprep.mubr.bf16.mxu0 0
        %1624 = vmatmul.mubr.bf16.gmra.mrb[0].mxu0 %v1583
        %v1625 = vpop.f32.mrb[0].mxu0
        %v1626 = vadd.f32 %v1551, %v1625
        %v1627 = vpop.f32.mrb[0].mxu0
        %v1628 = vadd.f32 %v1553, %v1627
        %v1629 = vpop.f32.mrb[0].mxu0
        %v1630 = vpop.f32.mrb[0].mxu0
        %1631 = vdwg.mxu0
        %v1632 = vld [vmem:[#allocation3 + $0x2] sm:$0x3f]
        %s1633 = scalar_lea.vmem %s3, 16
        %v1634 = vld [vmem:[%s1633] sm:$0x3]
        %v1636 = vcombine.high %v1632, %v1632
        %v1638 = vunpack.c.l.s4 1983009808
        %v1639 = vunpack.c.0.s8 %v1638
        %v1640 = vlaneseq
        %v1641 = vshrl.u32 %v1640, 7
        %v1642 = vsub.s32 %v1639, %v1641
        %v1643 = vrot.slane %v1632, %v1642
        %v1645 = vunpack.c.l.s4 1983009808
        %v1646 = vunpack.c.0.s8 %v1645
        %v1647 = vlaneseq
        %v1648 = vshrl.u32 %v1647, 7
        %v1649 = vsub.s32 %v1646, %v1648
        %v1650 = vrot.slane %v1636, %v1649
        %v1651 = vcombine.high %v1643, %v1643
        %1652 = vrot.lane.b32.xlu0 %v1643, 111
        %v1653 = vpop.permute.xlu0 %1652
        %1654 = vrot.lane.b32.xlu0 %v1651, 111
        %v1655 = vpop.permute.xlu0 %1654
        %1656 = vrot.lane.b32.xlu0 %v1650, 111
        %v1657 = vpop.permute.xlu0 %1656
        %v1658 = vsel %vm912, %v1653, %v1655
        %v1659 = vsel %vm912, %v1655, %v1657
        %v1661 = vsel %vm299, %v1634, 0
        %v1664 = vsel %vm303, %v1658, 0
        %v1667 = vsel %vm303, %v1659, 0
        %1669 = vmatprep.subr.bf16.mxu0 %v1667
        %1670 = vmatpush1.bf16.msra.mxu0 %v1664
        %1671 = vmatprep.subr.bf16.mxu0 0
        %1672 = vmatpush1.bf16.msra.mxu0 0
        %1673 = vmatprep.subr.bf16.mxu0 0
        %1674 = vmatpush1.bf16.msra.mxu0 0
        %1675 = vmatprep.subr.bf16.mxu0 0
        %1676 = vmatpush1.bf16.msra.mxu0 0
        %1677 = vmatprep.subr.bf16.mxu0 0
        %1678 = vmatpush1.bf16.msra.mxu0 0
        %1679 = vmatprep.subr.bf16.mxu0 0
        %1680 = vmatpush1.bf16.msra.mxu0 0
        %1681 = vmatprep.subr.bf16.mxu0 0
        %1682 = vmatpush1.bf16.msra.mxu0 0
        %1683 = vmatprep.subr.bf16.mxu0 0
        %1684 = vmatpush1.bf16.msra.mxu0 0
        %1685 = vmatprep.subr.bf16.mxu0 0
        %1686 = vmatpush1.bf16.msra.mxu0 0
        %1687 = vmatprep.subr.bf16.mxu0 0
        %1688 = vmatpush1.bf16.msra.mxu0 0
        %1689 = vmatprep.subr.bf16.mxu0 0
        %1690 = vmatpush1.bf16.msra.mxu0 0
        %1691 = vmatprep.subr.bf16.mxu0 0
        %1692 = vmatpush1.bf16.msra.mxu0 0
        %1693 = vmatprep.subr.bf16.mxu0 0
        %1694 = vmatpush1.bf16.msra.mxu0 0
        %1695 = vmatprep.subr.bf16.mxu0 0
        %1696 = vmatpush1.bf16.msra.mxu0 0
        %1697 = vmatprep.subr.bf16.mxu0 0
        %1698 = vmatpush1.bf16.msra.mxu0 0
        %1699 = vmatprep.subr.bf16.mxu0 0
        %1700 = vmatpush1.bf16.msra.mxu0 0
        %1701 = vmatprep.mubr.bf16.mxu0 0
        %1702 = vmatmul.mubr.bf16.gmra.mrb[0].mxu0 %v1661
        %v1703 = vpop.f32.mrb[0].mxu0
        %v1704 = vadd.f32 0.0, %v1703
        %v1705 = vpop.f32.mrb[0].mxu0
        %v1706 = vadd.f32 0.0, %v1705
        %v1707 = vpop.f32.mrb[0].mxu0
        %v1708 = vpop.f32.mrb[0].mxu0
        %1709 = vdwg.mxu0
        %v1710 = vadd.f32 %v1626, %v1704
        %v1711 = vadd.f32 %v1628, %v1706
        %v1712 = vld [vmem:[%s5] sm:$0x3]
        %v1714 = vlaneseq
        %v1715 = vshrl.u32 %v1714, 7
        %v1716 = vsub.s32 0, %v1715
        %v1717 = vrot.slane %v1712, %v1716
        %v1718 = vlaneseq
        %v1719 = vshrl.u32 %v1718, 7
        %v1720 = vsub.s32 1, %v1719
        %v1721 = vrot.slane %v1712, %v1720
        %v1724 = vmul.f32 %v1717, %v1474
        %v1725 = vmul.f32 %v1721, %v1475
        %v1726 = vadd.f32 %v1257, %v1724
        %v1727 = vadd.f32 %v1258, %v1725
        %v1728 = vld [vmem:[%s6] sm:$0x3]
        %v1730 = vlaneseq
        %v1731 = vshrl.u32 %v1730, 7
        %v1732 = vsub.s32 0, %v1731
        %v1733 = vrot.slane %v1728, %v1732
        %v1734 = vlaneseq
        %v1735 = vshrl.u32 %v1734, 7
        %v1736 = vsub.s32 1, %v1735
        %v1737 = vrot.slane %v1728, %v1736
        %v1740 = vmul.f32 %v1733, %v1710
        %v1741 = vmul.f32 %v1737, %v1711
        %v1742 = vadd.f32 %v1726, %v1740
        %v1743 = vadd.f32 %v1727, %v1741
        %v1744 = vld [vmem:[%s4] sm:$0xf]
        %1746 = vset.pattern.permute.xlu0 0
        %1747 = vperm.xlu0 %1746, %v1744
        %v1748 = vpop.permute.xlu0 %1747
        %v1750 = vadd.f32 %v1742, %v1748
        %v1751 = vadd.f32 %v1743, %v1748
        %v1752 = vmul.f32 %v1750, 0.5
        %v1753 = vmul.f32 %v1751, 0.5
        %v1754 = vmul.f32 %v1750, %v1750
        %v1755 = vmul.f32 %v1751, %v1751
        %v1756 = vmul.f32 %v1754, %v1750
        %v1757 = vmul.f32 %v1755, %v1751
        %v1758 = vmul.f32 %v1756, 0.044715
        %v1759 = vmul.f32 %v1757, 0.044715
        %v1760 = vadd.f32 %v1750, %v1758
        %v1761 = vadd.f32 %v1751, %v1759
        %v1762 = vmul.f32 %v1760, 0.7978846
        %v1763 = vmul.f32 %v1761, 0.7978846
        %v1764 = vtanh.pop %v1762
        %v1765 = vtanh.pop %v1763
        %v1766 = vadd.f32 %v1764, 1.0
        %v1767 = vadd.f32 %v1765, 1.0
        %v1768 = vmul.f32 %v1752, %v1766
        %v1769 = vmul.f32 %v1753, %v1767
        %v1770 = vld [vmem:[%s276] sm:$0xf]
        %v1771 = vunpack.c.l.bf16 %v1770
        %v1774 = vcombine.low %v1768, %v1769
        %v1776 = vadd.f32 %v1771, %v1774
        %v1777 = vrcp.pop 1.414
        %v1778 = vmul.f32 %v1776, %v1777
        %1779 = vst [vmem:[%s271] sm:$0xff] %v1778
        %s1780 = sand.u32 %s181, 1
        %s1781 = scalar_lea.sflag [#allocation5], %s1780
        %s1782 = sand.u32 %s181, 1
        %s1783 = smul.addr %s1782, 8
        %s1784 = scalar_lea.vmem [#allocation4], %s1783
        // Predicated region
        $region49: #{tpu_custom_call.1} parent=47 // pred_check
          %p1785 = pneg %p191
        $region50: #{tpu_custom_call.1} parent=47 // pred_check_branch
          %1787 = sbr.rel (%p1785) target = $region52
        $region51: #{tpu_custom_call.1} parent=47 // pred_region
          %s1789 = ssub.s32 128, 128
          %1790 = vsyncadd %s1781, %s1789
          %s1791 = smul.addr %s21, 2
          %s1792 = smul.addr %s1791, 64
          %s1793 = scalar_lea.hbm %s7, %s1792
          %s1795 = sshll.u32 %s1784, 4
          %s1796 = int_to_ptr.vmem [resolvable:$true] %s1795
          %1798 = dma.vmem_to_hbm [thread:$0]  %s1796, 128, %s1793, %s1781
        $region52: #{tpu_custom_call.1} parent=47 // pred_fallthru
          _
      $region48: #{tpu_custom_call.1} parent=5 // pred_fallthru
        _
      %p1799 = scmp.le.s32.totalorder 2, %s16
      // Predicated region
      $region53: #{tpu_custom_call.1} parent=5 // pred_check
        %p1800 = pneg %p1799
      $region54: #{tpu_custom_call.1} parent=5 // pred_check_branch
        %1802 = sbr.rel (%p1800) target = $region56
      $region55: #{tpu_custom_call.1} parent=5 // pred_region
        %s1803 = ssub.s32 %s16, 2
        // Predicated region
        $region57: #{tpu_custom_call.1} parent=55 // pred_check
          %p1804 = pneg %p197
        $region58: #{tpu_custom_call.1} parent=55 // pred_check_branch
          %1806 = sbr.rel (%p1804) target = $region60
        $region59: #{tpu_custom_call.1} parent=55 // pred_region
          %s1807 = sand.u32 %s182, 1
          %s1808 = scalar_lea.sflag [#allocation5], %s1807
          %s1809 = sand.u32 %s182, 1
          %s1810 = smul.addr %s1809, 8
          %s1811 = scalar_lea.vmem [#allocation4], %s1810
          %1812 = dma.done %s1808, 128
        $region60: #{tpu_custom_call.1} parent=55 // pred_fallthru
          _
      $region56: #{tpu_custom_call.1} parent=5 // pred_fallthru
        _
    $region6: #{tpu_custom_call.1} parent=1 // loop_footer
      %s20 = sadd.s32 1, %s16
    $region7: #{tpu_custom_call.1} parent=1 // loop_footer_branch
      %15 = sbr.rel target = $region3
    $region8: #{tpu_custom_call.1} parent=1 // loop_exit
      _
    %1813 = vsyncpa [#allocation5], 1
    %s1814 = scalar_lea.sflag [#allocation5], 1
    %1815 = vsyncpa %s1814, 1

</llo_original>
